<compile_context>
chip_gen: v7x
topology: tpu7x:2x2x1
jax: 0.10.0
libtpu: 0.0.40
codegen_flags: <defaults>
</compile_context>

<pallas_src>
import functools

import jax
import jax.numpy as jnp
from jax import lax
from jax.experimental import pallas as pl
from jax.experimental.pallas import tpu as pltpu


def _round_up(x, m):
    return (x + m - 1) // m * m


# ---------------------------------------------------------------------------
# Pass 1: tiled GraphConv  (A @ X) @ W + b  -> PReLU  + BN sum / sumsq stats
# ---------------------------------------------------------------------------

def _graphconv_kernel(adj_ref, x_ref, w_ref, bias_ref, nvalid_ref, a_conv_ref,
                      h_ref, sum_ref, sq_ref, acc_ref):
    b = pl.program_id(0)          # which of the 4 encoder passes
    m = pl.program_id(1)          # node-row block
    k = pl.program_id(2)          # adjacency contraction block (innermost)
    nk = pl.num_programs(2)

    @pl.when(k == 0)
    def _():
        acc_ref[...] = jnp.zeros_like(acc_ref)

    @pl.when(jnp.logical_and(m == 0, k == 0))
    def _():
        sum_ref[...] = jnp.zeros_like(sum_ref)
        sq_ref[...] = jnp.zeros_like(sq_ref)

    # A @ X accumulation over K tiles: bf16 inputs, f32 accumulate on the MXU.
    acc_ref[...] += jnp.dot(adj_ref[0], x_ref[0],
                            preferred_element_type=jnp.float32)

    @pl.when(k == nk - 1)
    def _():
        # linear projection + bias
        h = jnp.dot(acc_ref[...], w_ref[0],
                    preferred_element_type=jnp.float32) + bias_ref[0]
        # PReLU activation inside GraphConv (per-encoder scalar slope in SMEM)
        slope = a_conv_ref[b % 2]
        h = jnp.where(h > 0, h, slope * h)
        h_ref[0] = h
        # BatchNorm batch statistics: per-feature sum / sum-of-squares over the
        # *real* node rows only (padded rows masked out).
        valid = nvalid_ref[...]                         # (TM, 1) 0/1 mask
        hv = h * valid
        sum_ref[0] += jnp.sum(hv, axis=0, keepdims=True)
        sq_ref[0] += jnp.sum(hv * h, axis=0, keepdims=True)


# ---------------------------------------------------------------------------
# Pass 2: BatchNorm finalize (batch stats) + outer PReLU
# ---------------------------------------------------------------------------

def _bn_prelu_kernel(h_ref, sum_ref, sq_ref, g_ref, beta_ref, a_act_ref,
                     out_ref, *, inv_n, eps):
    b = pl.program_id(0)
    h = h_ref[0]
    mean = sum_ref[0] * inv_n
    var = jnp.maximum(sq_ref[0] * inv_n - mean * mean, 0.0)
    hn = (h - mean) * lax.rsqrt(var + eps) * g_ref[0] + beta_ref[0]
    slope = a_act_ref[b % 2]
    out_ref[0] = jnp.where(hn > 0, hn, slope * hn)


# ---------------------------------------------------------------------------
# SCE loss with fused masked-row selection (0/1 weight vector, weighted mean)
# ---------------------------------------------------------------------------

def _sce_kernel(x_ref, y_ref, w_ref, out_ref, *, alpha, inv_count):
    @pl.when(pl.program_id(0) == 0)
    def _():
        out_ref[...] = jnp.zeros_like(out_ref)
    x = x_ref[0]
    y = y_ref[0]
    # F.normalize(p=2, dim=-1) semantics: x / max(||x||, 1e-12)  (rsqrt -> EUP)
    xn = x * lax.rsqrt(jnp.maximum(jnp.sum(x * x, axis=-1, keepdims=True), 1e-24))
    yn = y * lax.rsqrt(jnp.maximum(jnp.sum(y * y, axis=-1, keepdims=True), 1e-24))
    cos = jnp.sum(xn * yn, axis=-1, keepdims=True)          # (TM, 1)
    loss = (1.0 - cos) ** alpha                              # integer alpha
    out_ref[...] += jnp.sum(loss * w_ref[...], axis=(0, 1),
                            keepdims=True) * inv_count


# ---------------------------------------------------------------------------
# Wrappers around pallas_call
# ---------------------------------------------------------------------------

def encoder_batch_forward(adj2, x4, params, *, n_real, tm=128, tk=128):
    """Runs all 4 encoder passes (enc, dec, enc, dec) in one tiled grid.

    adj2 : [2, Np, Np]  bf16   (0 = normalized adjacency, 1 = diffusion adj.)
    x4   : [4, Np, Fi]  bf16   per-pass input features (pass b uses graph /
                               encoder-parameter set b % 2)
    returns h_all : [4, Np, Fo] f32
    """
    n_pad = adj2.shape[1]
    f_in = x4.shape[2]
    f_out = params["w"].shape[2]
    tm = min(tm, n_pad)
    tk = min(tk, n_pad)

    nvalid = (jnp.arange(n_pad, dtype=jnp.int32) < n_real
              ).astype(jnp.float32)[:, None]                 # (Np, 1)

    # ---- pass 1: tiled GraphConv + inner PReLU + BN stats ----
    h_all, s_sum, s_sq = pl.pallas_call(
        _graphconv_kernel,
        grid=(4, n_pad // tm, n_pad // tk),
        in_specs=[
            pl.BlockSpec((1, tm, tk), lambda b, m, k: (b % 2, m, k)),     # adj
            pl.BlockSpec((1, tk, f_in), lambda b, m, k: (b, k, 0)),       # x
            pl.BlockSpec((1, f_in, f_out), lambda b, m, k: (b % 2, 0, 0)),  # W
            pl.BlockSpec((1, 1, f_out), lambda b, m, k: (b % 2, 0, 0)),   # bias
            pl.BlockSpec((tm, 1), lambda b, m, k: (m, 0)),                # valid
            pl.BlockSpec(memory_space=pltpu.MemorySpace.SMEM),            # a_conv
        ],
        out_specs=[
            pl.BlockSpec((1, tm, f_out), lambda b, m, k: (b, m, 0)),      # h
            pl.BlockSpec((1, 1, f_out), lambda b, m, k: (b, 0, 0)),       # sum
            pl.BlockSpec((1, 1, f_out), lambda b, m, k: (b, 0, 0)),       # sumsq
        ],
        out_shape=[
            jax.ShapeDtypeStruct((4, n_pad, f_out), jnp.float32),
            jax.ShapeDtypeStruct((4, 1, f_out), jnp.float32),
            jax.ShapeDtypeStruct((4, 1, f_out), jnp.float32),
        ],
        scratch_shapes=[pltpu.VMEM((tm, f_in), jnp.float32)],
        compiler_params=pltpu.CompilerParams(
            dimension_semantics=("parallel", "arbitrary", "arbitrary")),
    )(adj2, x4, params["w"], params["b"], nvalid, params["a_conv"])

    # ---- pass 2: BatchNorm finalize + outer PReLU ----
    out = pl.pallas_call(
        functools.partial(_bn_prelu_kernel, inv_n=1.0 / n_real, eps=1e-5),
        grid=(4, n_pad // tm),
        in_specs=[
            pl.BlockSpec((1, tm, f_out), lambda b, m: (b, m, 0)),         # h
            pl.BlockSpec((1, 1, f_out), lambda b, m: (b, 0, 0)),          # sum
            pl.BlockSpec((1, 1, f_out), lambda b, m: (b, 0, 0)),          # sumsq
            pl.BlockSpec((1, 1, f_out), lambda b, m: (b % 2, 0, 0)),      # bn_g
            pl.BlockSpec((1, 1, f_out), lambda b, m: (b % 2, 0, 0)),      # bn_b
            pl.BlockSpec(memory_space=pltpu.MemorySpace.SMEM),            # a_act
        ],
        out_specs=pl.BlockSpec((1, tm, f_out), lambda b, m: (b, m, 0)),
        out_shape=jax.ShapeDtypeStruct((4, n_pad, f_out), jnp.float32),
        compiler_params=pltpu.CompilerParams(
            dimension_semantics=("parallel", "parallel")),
    )(h_all, s_sum, s_sq, params["bn_g"], params["bn_b"], params["a_act"])

    return out


def sce_loss_pallas(h_all, idx_x, idx_y, row_weight, *, alpha, num_rows, tm=128):
    """mean over masked rows of (1 - cos(h_all[idx_x], h_all[idx_y]))^alpha."""
    n_pad, f_out = h_all.shape[1], h_all.shape[2]
    tm = min(tm, n_pad)
    out = pl.pallas_call(
        functools.partial(_sce_kernel, alpha=alpha, inv_count=1.0 / num_rows),
        grid=(n_pad // tm,),
        in_specs=[
            pl.BlockSpec((1, tm, f_out), lambda m: (idx_x, m, 0)),
            pl.BlockSpec((1, tm, f_out), lambda m: (idx_y, m, 0)),
            pl.BlockSpec((tm, 1), lambda m: (m, 0)),
        ],
        out_specs=pl.BlockSpec((1, 1), lambda m: (0, 0)),
        out_shape=jax.ShapeDtypeStruct((1, 1), jnp.float32),
        compiler_params=pltpu.CompilerParams(
            dimension_semantics=("arbitrary",)),
    )(h_all, h_all, row_weight)
    return out[0, 0]


# ---------------------------------------------------------------------------
# Masking logic (random index glue — plain JAX, mirrors `mask()` in model.py)
# ---------------------------------------------------------------------------

def make_mask(key, num_nodes, mask_rate, noise):
    k1, k2, k3 = jax.random.split(key, 3)
    perm = jax.random.permutation(k1, num_nodes)
    num_mask = int(mask_rate * num_nodes)
    mask_nodes = perm[:num_mask]
    num_noise = int(noise * num_mask)
    perm_mask = jax.random.permutation(k2, num_mask)
    token_nodes = mask_nodes[perm_mask[: int((1 - noise) * num_mask)]]
    noise_nodes = mask_nodes[perm_mask[num_mask - num_noise:]]
    noise_to_be_chosen = jax.random.permutation(k3, num_nodes)[:num_noise]
    return token_nodes, noise_nodes, noise_to_be_chosen, mask_nodes


def apply_mask(feat, token_nodes, noise_nodes, noise_src, mask_token):
    x = feat
    x = x.at[token_nodes].set(0.0)
    x = x.at[noise_nodes].set(feat[noise_src])
    x = x.at[token_nodes].add(mask_token)          # broadcast (1, F_in)
    return x


# ---------------------------------------------------------------------------
# MG forward
# ---------------------------------------------------------------------------

def mg_forward(params, adj_norm, adj_diff, feat, key, *,
               rate, rate1, noise, alpha, beta, beta1, tm=128, tk=128):
    n, f_in = feat.shape
    f_out = params["enc"]["w"].shape[1]
    n_pad = _round_up(n, 128)
    f_in_pad = _round_up(f_in, 128)
    f_out_pad = _round_up(f_out, 128)

    k1, k2 = jax.random.split(key)

    # ---- random masking (two rounds) ----
    tok1, noi1, chosen1, mask_nodes1 = make_mask(k1, n, rate, noise)
    x1 = apply_mask(feat, tok1, noi1, chosen1, params["enc_mask_token"])
    tok2, noi2, chosen2, mask_nodes2 = make_mask(k2, n, rate1, noise)
    x2 = apply_mask(feat, tok2, noi2, chosen2, params["enc_mask_token1"])

    # ---- pad (lane-dense) & stack for the batched 4-pass encoder kernel ----
    def pad2(a, r, c):
        return jnp.pad(a, ((0, r - a.shape[0]), (0, c - a.shape[1])))

    adj2 = jnp.stack([pad2(adj_norm, n_pad, n_pad),
                      pad2(adj_diff, n_pad, n_pad)]).astype(jnp.bfloat16)
    x4 = jnp.stack([pad2(x1, n_pad, f_in_pad),      # round1: enc(graph, x)
                    pad2(feat, n_pad, f_in_pad),    # round1: dec(diff, feat)
                    pad2(feat, n_pad, f_in_pad),    # round2: enc(graph, feat)
                    pad2(x2, n_pad, f_in_pad)       # round2: dec(diff, x)
                    ]).astype(jnp.bfloat16)

    enc, dec = params["enc"], params["dec"]
    stacked = {
        "w": jnp.stack([pad2(enc["w"], f_in_pad, f_out_pad),
                        pad2(dec["w"], f_in_pad, f_out_pad)]),
        "b": jnp.stack([pad2(enc["b"], 1, f_out_pad),
                        pad2(dec["b"], 1, f_out_pad)]),
        "bn_g": jnp.stack([pad2(enc["bn_g"], 1, f_out_pad),
                           pad2(dec["bn_g"], 1, f_out_pad)]),
        "bn_b": jnp.stack([pad2(enc["bn_b"], 1, f_out_pad),
                           pad2(dec["bn_b"], 1, f_out_pad)]),
        "a_conv": jnp.stack([enc["a_conv"], dec["a_conv"]]),   # (2,) SMEM
        "a_act": jnp.stack([enc["a_act"], dec["a_act"]]),      # (2,) SMEM
    }

    h_all = encoder_batch_forward(adj2, x4, stacked, n_real=n, tm=tm, tk=tk)

    # ---- fused masked-row SCE losses (0/1 weight vectors, no jnp.take) ----
    num_mask1 = int(rate * n)
    num_mask2 = int(rate1 * n)
    w1 = jnp.zeros((n_pad,), jnp.float32).at[mask_nodes1].set(1.0)[:, None]
    w2 = jnp.zeros((n_pad,), jnp.float32).at[mask_nodes2].set(1.0)[:, None]

    loss1 = sce_loss_pallas(h_all, 0, 1, w1, alpha=beta, num_rows=num_mask1, tm=tm)
    loss2 = sce_loss_pallas(h_all, 2, 3, w2, alpha=beta1, num_rows=num_mask2, tm=tm)

    return alpha * loss1 + (1.0 - alpha) * loss2


# ---------------------------------------------------------------------------
# Deterministic parameter / graph construction
# ---------------------------------------------------------------------------

def init_encoder_params(key, f_in, f_out, scale=0.1):
    (kw,) = jax.random.split(key, 1)
    return {
        "w": scale * jax.random.normal(kw, (f_in, f_out), jnp.float32),
        "b": jnp.zeros((1, f_out), jnp.float32),
        "a_conv": jnp.array(0.25, jnp.float32),   # PReLU inside GraphConv
        "a_act": jnp.array(0.25, jnp.float32),    # outer PReLU
        "bn_g": jnp.ones((1, f_out), jnp.float32),
        "bn_b": jnp.zeros((1, f_out), jnp.float32),
    }


def build_graphs(key, n):
    ka, kd = jax.random.split(key)
    # random sparse-ish symmetric graph with self-loops (avoids zero degree)
    a = (jax.random.uniform(ka, (n, n)) < 0.1).astype(jnp.float32)
    a = jnp.minimum(a + a.T + jnp.eye(n, dtype=jnp.float32), 1.0)
    deg = jnp.sum(a, axis=1)
    d_inv_sqrt = 1.0 / jnp.sqrt(deg)
    adj_norm = a * d_inv_sqrt[:, None] * d_inv_sqrt[None, :]   # norm='both'
    # diffusion graph: same connectivity, random positive edge weights
    # (edge_weight folded into the dense matrix; norm='none' uses it directly)
    adj_diff = a * jax.random.uniform(kd, (n, n), minval=0.1, maxval=1.0)
    return adj_norm, adj_diff


if __name__ == "__main__":
    N, F_IN, F_OUT = 256, 32, 64
    RATE, RATE1, NOISE = 0.5, 0.5, 0.05
    ALPHA, BETA, BETA1 = 0.6, 3, 2     # p1 = p2 = 0.0 (dropout is identity)

    root = jax.random.PRNGKey(0)
    k_graph, k_feat, k_enc, k_dec, k_mask = jax.random.split(root, 5)

    adj_norm, adj_diff = build_graphs(k_graph, N)
    feat = jax.random.normal(k_feat, (N, F_IN), jnp.float32)

    params = {
        "enc": init_encoder_params(k_enc, F_IN, F_OUT),
        "dec": init_encoder_params(k_dec, F_IN, F_OUT),
        "enc_mask_token": jnp.zeros((1, F_IN), jnp.float32),   # nn.Parameter(zeros)
        "enc_mask_token1": jnp.zeros((1, F_IN), jnp.float32),
    }

    loss = mg_forward(params, adj_norm, adj_diff, feat, k_mask,
                      rate=RATE, rate1=RATE1, noise=NOISE,
                      alpha=ALPHA, beta=BETA, beta1=BETA1)
    loss = jax.block_until_ready(loss)
    assert jnp.isfinite(loss), f"non-finite loss: {loss}"
    print("KERNEL_OK")
</pallas_src>

<mosaic_0001>
module attributes {stable_mosaic.version = 11 : i64} {
  func.func @_graphconv_kernel(%arg0: i32, %arg1: i32, %arg2: i32, %arg3: memref<1x128x128xbf16, #tpu.memory_space<vmem>>, %arg4: memref<1x128x128xbf16, #tpu.memory_space<vmem>>, %arg5: memref<1x128x128xf32, #tpu.memory_space<vmem>>, %arg6: memref<1x1x128xf32, #tpu.memory_space<vmem>>, %arg7: memref<128x1xf32, #tpu.memory_space<vmem>>, %arg8: memref<2xf32, #tpu.memory_space<smem>>, %arg9: memref<1x128x128xf32, #tpu.memory_space<vmem>>, %arg10: memref<1x1x128xf32, #tpu.memory_space<vmem>>, %arg11: memref<1x1x128xf32, #tpu.memory_space<vmem>>, %arg12: memref<128x128xf32, #tpu.memory_space<vmem>>) attributes {dimension_semantics = [#tpu.dimension_semantics<parallel>, #tpu.dimension_semantics<arbitrary>, #tpu.dimension_semantics<arbitrary>], iteration_bounds = array<i64: 4, 2, 2>, scalar_prefetch = 0 : i64, scratch_operands = 1 : i64, tpu.core_type = #tpu.core_type<tc>, window_params = [{transform_indices = @transform_0, window_bounds = array<i64: 1, 128, 128>}, {transform_indices = @transform_1, window_bounds = array<i64: 1, 128, 128>}, {transform_indices = @transform_2, window_bounds = array<i64: 1, 128, 128>}, {transform_indices = @transform_3, window_bounds = array<i64: 1, 1, 128>}, {transform_indices = @transform_4, window_bounds = array<i64: 128, 1>}, {transform_indices = @transform_5, window_bounds = array<i64: 2>}, {transform_indices = @transform_6, window_bounds = array<i64: 1, 128, 128>}, {transform_indices = @transform_7, window_bounds = array<i64: 1, 1, 128>}, {transform_indices = @transform_8, window_bounds = array<i64: 1, 1, 128>}]} {
    %c0_i32 = arith.constant 0 : i32
    %0 = arith.cmpi eq, %arg2, %c0_i32 : i32
    %1 = arith.extui %0 : i1 to i32
    %c0_i32_0 = arith.constant 0 : i32
    %2 = arith.cmpi ne, %1, %c0_i32_0 : i32
    scf.if %2 {
      %cst_14 = arith.constant 0.000000e+00 : f32
      %19 = vector.broadcast %cst_14 : f32 to vector<128x128xf32>
      %c0_15 = arith.constant 0 : index
      %c0_16 = arith.constant 0 : index
      %20 = vector.load %arg12[%c0_15, %c0_16] : memref<128x128xf32, #tpu.memory_space<vmem>>, vector<128x128xf32>
      tpu.vector_store %arg12[%c0_15, %c0_16], %19 {strides = array<i32>} : memref<128x128xf32, #tpu.memory_space<vmem>>, vector<128x128xf32>,
    } else {
    }
    %c0_i32_1 = arith.constant 0 : i32
    %3 = arith.cmpi eq, %arg1, %c0_i32_1 : i32
    %c0_i32_2 = arith.constant 0 : i32
    %4 = arith.cmpi eq, %arg2, %c0_i32_2 : i32
    %5 = arith.andi %3, %4 : i1
    %6 = arith.extui %5 : i1 to i32
    %c0_i32_3 = arith.constant 0 : i32
    %7 = arith.cmpi ne, %6, %c0_i32_3 : i32
    scf.if %7 {
      %cst_14 = arith.constant 0.000000e+00 : f32
      %19 = vector.broadcast %cst_14 : f32 to vector<1x1x128xf32>
      %c0_15 = arith.constant 0 : index
      %c0_16 = arith.constant 0 : index
      %c0_17 = arith.constant 0 : index
      %20 = vector.load %arg10[%c0_15, %c0_16, %c0_17] : memref<1x1x128xf32, #tpu.memory_space<vmem>>, vector<1x1x128xf32>
      tpu.vector_store %arg10[%c0_15, %c0_16, %c0_17], %19 {strides = array<i32>} : memref<1x1x128xf32, #tpu.memory_space<vmem>>, vector<1x1x128xf32>,
      %cst_18 = arith.constant 0.000000e+00 : f32
      %21 = vector.broadcast %cst_18 : f32 to vector<1x1x128xf32>
      %c0_19 = arith.constant 0 : index
      %c0_20 = arith.constant 0 : index
      %c0_21 = arith.constant 0 : index
      %22 = vector.load %arg11[%c0_19, %c0_20, %c0_21] : memref<1x1x128xf32, #tpu.memory_space<vmem>>, vector<1x1x128xf32>
      tpu.vector_store %arg11[%c0_19, %c0_20, %c0_21], %21 {strides = array<i32>} : memref<1x1x128xf32, #tpu.memory_space<vmem>>, vector<1x1x128xf32>,
    } else {
    }
    %c0 = arith.constant 0 : index
    %c0_4 = arith.constant 0 : index
    %8 = vector.load %arg12[%c0, %c0_4] : memref<128x128xf32, #tpu.memory_space<vmem>>, vector<128x128xf32>
    %c0_5 = arith.constant 0 : index
    %c0_6 = arith.constant 0 : index
    %c0_7 = arith.constant 0 : index
    %9 = vector.load %arg3[%c0_5, %c0_6, %c0_7] : memref<1x128x128xbf16, #tpu.memory_space<vmem>>, vector<1x128x128xbf16>
    %10 = vector.shape_cast %9 : vector<1x128x128xbf16> to vector<128x128xbf16>
    %c0_8 = arith.constant 0 : index
    %c0_9 = arith.constant 0 : index
    %c0_10 = arith.constant 0 : index
    %11 = vector.load %arg4[%c0_8, %c0_9, %c0_10] : memref<1x128x128xbf16, #tpu.memory_space<vmem>>, vector<1x128x128xbf16>
    %12 = vector.shape_cast %11 : vector<1x128x128xbf16> to vector<128x128xbf16>
    %cst = arith.constant dense<0.000000e+00> : vector<128x128xf32>
    %13 = tpu.matmul %10, %12, %cst {dimension_numbers = #tpu.dot_dimension_numbers<[1], [0], [0], [1], [0, 0, 1, 1], [], []>} : vector<128x128xbf16>, vector<128x128xbf16>, vector<128x128xf32> -> vector<128x128xf32>
    %14 = arith.addf %8, %13 : vector<128x128xf32>
    %c0_11 = arith.constant 0 : index
    %c0_12 = arith.constant 0 : index
    %15 = vector.load %arg12[%c0_11, %c0_12] : memref<128x128xf32, #tpu.memory_space<vmem>>, vector<128x128xf32>
    tpu.vector_store %arg12[%c0_11, %c0_12], %14 {strides = array<i32>} : memref<128x128xf32, #tpu.memory_space<vmem>>, vector<128x128xf32>,
    %c1_i32 = arith.constant 1 : i32
    %16 = arith.cmpi eq, %arg2, %c1_i32 : i32
    %17 = arith.extui %16 : i1 to i32
    %c0_i32_13 = arith.constant 0 : i32
    %18 = arith.cmpi ne, %17, %c0_i32_13 : i32
    scf.if %18 {
      %c0_14 = arith.constant 0 : index
      %c0_15 = arith.constant 0 : index
      %19 = vector.load %arg12[%c0_14, %c0_15] : memref<128x128xf32, #tpu.memory_space<vmem>>, vector<128x128xf32>
      %c0_16 = arith.constant 0 : index
      %c0_17 = arith.constant 0 : index
      %c0_18 = arith.constant 0 : index
      %20 = vector.load %arg5[%c0_16, %c0_17, %c0_18] : memref<1x128x128xf32, #tpu.memory_space<vmem>>, vector<1x128x128xf32>
      %21 = vector.shape_cast %20 : vector<1x128x128xf32> to vector<128x128xf32>
      %cst_19 = arith.constant dense<0.000000e+00> : vector<128x128xf32>
      %22 = tpu.matmul %19, %21, %cst_19 {dimension_numbers = #tpu.dot_dimension_numbers<[1], [0], [0], [1], [0, 0, 1, 1], [], []>} : vector<128x128xf32>, vector<128x128xf32>, vector<128x128xf32> -> vector<128x128xf32>
      %c0_20 = arith.constant 0 : index
      %c0_21 = arith.constant 0 : index
      %c0_22 = arith.constant 0 : index
      %23 = vector.load %arg6[%c0_20, %c0_21, %c0_22] : memref<1x1x128xf32, #tpu.memory_space<vmem>>, vector<1x1x128xf32>
      %24 = vector.shape_cast %23 : vector<1x1x128xf32> to vector<1x128xf32>
      %25 = vector.broadcast %24 : vector<1x128xf32> to vector<128x128xf32>
      %26 = arith.addf %22, %25 : vector<128x128xf32>
      %c2_i32 = arith.constant 2 : i32
      %c0_i32_23 = arith.constant 0 : i32
      %27 = arith.cmpi eq, %c2_i32, %c0_i32_23 : i32
      %c1_i32_24 = arith.constant 1 : i32
      %28 = arith.select %27, %c1_i32_24, %c2_i32 : i32
      %29 = arith.remsi %arg0, %28 : i32
      %c0_i32_25 = arith.constant 0 : i32
      %30 = arith.cmpi ne, %29, %c0_i32_25 : i32
      %c0_i32_26 = arith.constant 0 : i32
      %31 = arith.cmpi slt, %29, %c0_i32_26 : i32
      %c0_i32_27 = arith.constant 0 : i32
      %32 = arith.cmpi slt, %28, %c0_i32_27 : i32
      %33 = arith.xori %31, %32 : i1
      %34 = arith.andi %33, %30 : i1
      %35 = arith.addi %29, %28 : i32
      %36 = arith.select %34, %35, %29 : i32
      %37 = arith.index_cast %36 : i32 to index
      %38 = memref.load %arg8[%37] : memref<2xf32, #tpu.memory_space<smem>>
      %cst_28 = arith.constant 0.000000e+00 : f32
      %39 = vector.broadcast %cst_28 : f32 to vector<128x128xf32>
      %40 = arith.cmpf ogt, %26, %39 : vector<128x128xf32>
      %41 = vector.broadcast %38 : f32 to vector<128x128xf32>
      %42 = arith.mulf %41, %26 : vector<128x128xf32>
      %43 = arith.select %40, %26, %42 : vector<128x128xi1>, vector<128x128xf32>
      %c0_29 = arith.constant 0 : index
      %c0_30 = arith.constant 0 : index
      %c0_31 = arith.constant 0 : index
      %44 = vector.load %arg9[%c0_29, %c0_30, %c0_31] : memref<1x128x128xf32, #tpu.memory_space<vmem>>, vector<1x128x128xf32>
      %45 = vector.shape_cast %44 : vector<1x128x128xf32> to vector<128x128xf32>
      %46 = vector.shape_cast %43 : vector<128x128xf32> to vector<1x128x128xf32>
      tpu.vector_store %arg9[%c0_29, %c0_30, %c0_31], %46 {strides = array<i32>} : memref<1x128x128xf32, #tpu.memory_space<vmem>>, vector<1x128x128xf32>,
      %c0_32 = arith.constant 0 : index
      %c0_33 = arith.constant 0 : index
      %47 = vector.load %arg7[%c0_32, %c0_33] : memref<128x1xf32, #tpu.memory_space<vmem>>, vector<128x1xf32>
      %48 = vector.broadcast %47 : vector<128x1xf32> to vector<128x128xf32>
      %49 = arith.mulf %43, %48 : vector<128x128xf32>
      %c0_34 = arith.constant 0 : index
      %c0_35 = arith.constant 0 : index
      %c0_36 = arith.constant 0 : index
      %50 = vector.load %arg10[%c0_34, %c0_35, %c0_36] : memref<1x1x128xf32, #tpu.memory_space<vmem>>, vector<1x1x128xf32>
      %51 = vector.shape_cast %50 : vector<1x1x128xf32> to vector<1x128xf32>
      %cst_37 = arith.constant dense<0.000000e+00> : vector<128xf32>
      %52 = vector.multi_reduction <add>, %49, %cst_37 [0] : vector<128x128xf32> to vector<128xf32>
      %53 = vector.shape_cast %52 : vector<128xf32> to vector<1x128xf32>
      %54 = arith.addf %51, %53 : vector<1x128xf32>
      %c0_38 = arith.constant 0 : index
      %c0_39 = arith.constant 0 : index
      %c0_40 = arith.constant 0 : index
      %55 = vector.load %arg10[%c0_38, %c0_39, %c0_40] : memref<1x1x128xf32, #tpu.memory_space<vmem>>, vector<1x1x128xf32>
      %56 = vector.shape_cast %55 : vector<1x1x128xf32> to vector<1x128xf32>
      %57 = vector.shape_cast %54 : vector<1x128xf32> to vector<1x1x128xf32>
      tpu.vector_store %arg10[%c0_38, %c0_39, %c0_40], %57 {strides = array<i32>} : memref<1x1x128xf32, #tpu.memory_space<vmem>>, vector<1x1x128xf32>,
      %c0_41 = arith.constant 0 : index
      %c0_42 = arith.constant 0 : index
      %c0_43 = arith.constant 0 : index
      %58 = vector.load %arg11[%c0_41, %c0_42, %c0_43] : memref<1x1x128xf32, #tpu.memory_space<vmem>>, vector<1x1x128xf32>
      %59 = vector.shape_cast %58 : vector<1x1x128xf32> to vector<1x128xf32>
      %60 = arith.mulf %49, %43 : vector<128x128xf32>
      %cst_44 = arith.constant dense<0.000000e+00> : vector<128xf32>
      %61 = vector.multi_reduction <add>, %60, %cst_44 [0] : vector<128x128xf32> to vector<128xf32>
      %62 = vector.shape_cast %61 : vector<128xf32> to vector<1x128xf32>
      %63 = arith.addf %59, %62 : vector<1x128xf32>
      %c0_45 = arith.constant 0 : index
      %c0_46 = arith.constant 0 : index
      %c0_47 = arith.constant 0 : index
      %64 = vector.load %arg11[%c0_45, %c0_46, %c0_47] : memref<1x1x128xf32, #tpu.memory_space<vmem>>, vector<1x1x128xf32>
      %65 = vector.shape_cast %64 : vector<1x1x128xf32> to vector<1x128xf32>
      %66 = vector.shape_cast %63 : vector<1x128xf32> to vector<1x1x128xf32>
      tpu.vector_store %arg11[%c0_45, %c0_46, %c0_47], %66 {strides = array<i32>} : memref<1x1x128xf32, #tpu.memory_space<vmem>>, vector<1x1x128xf32>,
    } else {
    }
    return
  }
  func.func @transform_0(%arg0: i32, %arg1: i32, %arg2: i32) -> (i32, i32, i32) {
    %c2_i32 = arith.constant 2 : i32
    %c0_i32 = arith.constant 0 : i32
    %0 = arith.cmpi eq, %c2_i32, %c0_i32 : i32
    %c1_i32 = arith.constant 1 : i32
    %1 = arith.select %0, %c1_i32, %c2_i32 : i32
    %2 = arith.remsi %arg0, %1 : i32
    %c0_i32_0 = arith.constant 0 : i32
    %3 = arith.cmpi ne, %2, %c0_i32_0 : i32
    %c0_i32_1 = arith.constant 0 : i32
    %4 = arith.cmpi slt, %2, %c0_i32_1 : i32
    %c0_i32_2 = arith.constant 0 : i32
    %5 = arith.cmpi slt, %1, %c0_i32_2 : i32
    %6 = arith.xori %4, %5 : i1
    %7 = arith.andi %6, %3 : i1
    %8 = arith.addi %2, %1 : i32
    %9 = arith.select %7, %8, %2 : i32
    %c0_i32_3 = arith.constant 0 : i32
    return %9, %arg1, %arg2 : i32, i32, i32
  }
  func.func @transform_1(%arg0: i32, %arg1: i32, %arg2: i32) -> (i32, i32, i32) {
    %c0_i32 = arith.constant 0 : i32
    %c0_i32_0 = arith.constant 0 : i32
    return %arg0, %arg2, %c0_i32 : i32, i32, i32
  }
  func.func @transform_2(%arg0: i32, %arg1: i32, %arg2: i32) -> (i32, i32, i32) {
    %c2_i32 = arith.constant 2 : i32
    %c0_i32 = arith.constant 0 : i32
    %0 = arith.cmpi eq, %c2_i32, %c0_i32 : i32
    %c1_i32 = arith.constant 1 : i32
    %1 = arith.select %0, %c1_i32, %c2_i32 : i32
    %2 = arith.remsi %arg0, %1 : i32
    %c0_i32_0 = arith.constant 0 : i32
    %3 = arith.cmpi ne, %2, %c0_i32_0 : i32
    %c0_i32_1 = arith.constant 0 : i32
    %4 = arith.cmpi slt, %2, %c0_i32_1 : i32
    %c0_i32_2 = arith.constant 0 : i32
    %5 = arith.cmpi slt, %1, %c0_i32_2 : i32
    %6 = arith.xori %4, %5 : i1
    %7 = arith.andi %6, %3 : i1
    %8 = arith.addi %2, %1 : i32
    %9 = arith.select %7, %8, %2 : i32
    %c0_i32_3 = arith.constant 0 : i32
    %c0_i32_4 = arith.constant 0 : i32
    %c0_i32_5 = arith.constant 0 : i32
    return %9, %c0_i32_3, %c0_i32_4 : i32, i32, i32
  }
  func.func @transform_3(%arg0: i32, %arg1: i32, %arg2: i32) -> (i32, i32, i32) {
    %c2_i32 = arith.constant 2 : i32
    %c0_i32 = arith.constant 0 : i32
    %0 = arith.cmpi eq, %c2_i32, %c0_i32 : i32
    %c1_i32 = arith.constant 1 : i32
    %1 = arith.select %0, %c1_i32, %c2_i32 : i32
    %2 = arith.remsi %arg0, %1 : i32
    %c0_i32_0 = arith.constant 0 : i32
    %3 = arith.cmpi ne, %2, %c0_i32_0 : i32
    %c0_i32_1 = arith.constant 0 : i32
    %4 = arith.cmpi slt, %2, %c0_i32_1 : i32
    %c0_i32_2 = arith.constant 0 : i32
    %5 = arith.cmpi slt, %1, %c0_i32_2 : i32
    %6 = arith.xori %4, %5 : i1
    %7 = arith.andi %6, %3 : i1
    %8 = arith.addi %2, %1 : i32
    %9 = arith.select %7, %8, %2 : i32
    %c0_i32_3 = arith.constant 0 : i32
    %c0_i32_4 = arith.constant 0 : i32
    %c0_i32_5 = arith.constant 0 : i32
    return %9, %c0_i32_3, %c0_i32_4 : i32, i32, i32
  }
  func.func @transform_4(%arg0: i32, %arg1: i32, %arg2: i32) -> (i32, i32) {
    %c0_i32 = arith.constant 0 : i32
    %c0_i32_0 = arith.constant 0 : i32
    return %arg1, %c0_i32 : i32, i32
  }
  func.func @transform_5(%arg0: i32, %arg1: i32, %arg2: i32) -> i32 {
    %c0_i32 = arith.constant 0 : i32
    %c0_i32_0 = arith.constant 0 : i32
    return %c0_i32 : i32
  }
  func.func @transform_6(%arg0: i32, %arg1: i32, %arg2: i32) -> (i32, i32, i32) {
    %c0_i32 = arith.constant 0 : i32
    %c0_i32_0 = arith.constant 0 : i32
    return %arg0, %arg1, %c0_i32 : i32, i32, i32
  }
  func.func @transform_7(%arg0: i32, %arg1: i32, %arg2: i32) -> (i32, i32, i32) {
    %c0_i32 = arith.constant 0 : i32
    %c0_i32_0 = arith.constant 0 : i32
    %c0_i32_1 = arith.constant 0 : i32
    return %arg0, %c0_i32, %c0_i32_0 : i32, i32, i32
  }
  func.func @transform_8(%arg0: i32, %arg1: i32, %arg2: i32) -> (i32, i32, i32) {
    %c0_i32 = arith.constant 0 : i32
    %c0_i32_0 = arith.constant 0 : i32
    %c0_i32_1 = arith.constant 0 : i32
    return %arg0, %c0_i32, %c0_i32_0 : i32, i32, i32
  }
}

</mosaic_0001>

<llo_original>
// kernel: tpu_custom_call.1
$region0: #{tpu_custom_call.1}
  #allocation0 [shape = 'u32[]', space=smem, size = 0x4, offset = 0x4, fixed_abs, tag = 'smem constant byte address 0x4 - core index']
  #allocation1 [shape = 'u32[144,128]{1,0:T(1,128)}', space=vmem, size = 0x12000, scoped, tag = 'internal scratch']
  #allocation2 [shape = 'f32[128,128]{1,0:T(8,128)}', space=vmem, size = 0x10000, scoped, tag = 'scratch operand']
  %s0 = inlined_call_operand.hbm [shape: bf16[2,256,256], index: 0, kind: input, shape index: {}]
  %s1 = inlined_call_operand.hbm [shape: bf16[4,256,128], index: 1, kind: input, shape index: {}]
  %s2 = inlined_call_operand.vmem [shape: f32[2,128,128], index: 2, kind: input, shape index: {}]
  %s3 = inlined_call_operand.vmem [shape: f32[2,1,128], index: 3, kind: input, shape index: {}]
  %s4 = inlined_call_operand.vmem [shape: f32[256,1], index: 4, kind: input, shape index: {}]
  %s5 = inlined_call_operand.vmem [shape: f32[2], index: 5, kind: input, shape index: {}]
  %s6 = inlined_call_operand.hbm [shape: f32[4,256,128], index: 6, kind: output, shape index: {0}]
  %s7 = inlined_call_operand.hbm [shape: f32[4,1,128], index: 7, kind: output, shape index: {1}]
  %s8 = inlined_call_operand.hbm [shape: f32[4,1,128], index: 8, kind: output, shape index: {2}]
  %9 = xla_tuple %s6, %s7, %s8
  %s10 = sld [smem:[#allocation0]]
  $region97: #{tpu_custom_call.1} parent=0
    _
  %s12 = ssub.s32 1, %s10
  %s13 = scalar_select 0, %s12, %s10
  $region1: #{tpu_custom_call.1} parent=0
    #allocation3 [shape = 'u8[65536]{0}', space=vmem, size = 0x10000, scoped, tag = 'input window, operand 0']
    #allocation4 [shape = 's32[2]{0}', space=sflag, size = 0x8, scoped, tag = 'scoped memory for tpu_custom_call.1']
    #allocation5 [shape = 's32[2]{0}', space=sflag, size = 0x8, scoped, tag = 'scoped memory for tpu_custom_call.1']
    #allocation6 [shape = 's32[2]{0}', space=sflag, size = 0x8, scoped, tag = 'scoped memory for tpu_custom_call.1']
    #allocation7 [shape = 'u8[65536]{0}', space=vmem, size = 0x10000, scoped, tag = 'input window, operand 1']
    #allocation8 [shape = 's32[2]{0}', space=sflag, size = 0x8, scoped, tag = 'scoped memory for tpu_custom_call.1']
    #allocation9 [shape = 'u8[512]{0}', space=smem, size = 0x200, scoped, tag = 'input window, operand 5, single buffered']
    #allocation10 [shape = 'u8[131072]{0}', space=vmem, size = 0x20000, scoped, tag = 'output window, operand 0']
    #allocation11 [shape = 'u8[1024]{0}', space=vmem, size = 0x400, scoped, tag = 'output window, operand 1']
    #allocation12 [shape = 's32[2]{0}', space=sflag, size = 0x8, scoped, tag = 'scoped memory for tpu_custom_call.1']
    #allocation13 [shape = 'u8[1024]{0}', space=vmem, size = 0x400, scoped, tag = 'output window, operand 2']
    %14 = vsyncpa [#allocation4], 0
    %s15 = scalar_lea.sflag [#allocation4], 1
    %16 = vsyncpa %s15, 0
    %17 = vsyncpa [#allocation8], 0
    %s18 = scalar_lea.sflag [#allocation8], 1
    %19 = vsyncpa %s18, 0
    %20 = vsyncpa [#allocation6], 0
    %21 = vsyncpa [#allocation5], 0
    %s22 = scalar_lea.sflag [#allocation5], 1
    %23 = vsyncpa %s22, 0
    %24 = vsyncpa [#allocation12], 0
    %s25 = scalar_lea.sflag [#allocation12], 1
    %26 = vsyncpa %s25, 0
    loop: start=0, step=1, limit=18
    $region2: #{tpu_custom_call.1} parent=1 // loop_pre_header
      _
    $region3: #{tpu_custom_call.1} parent=1 // loop_header
      %s28 = sphi 0, %s32
      %p29 = scmp.ge.s32.totalorder %s28, 18
      %s35 = sphi 0, %s54
      %s36 = sphi 0, %s50
      %s37 = sphi 0, %s46
      %s38 = sphi 0, %s35
      %s39 = sphi 0, %s36
      %s40 = sphi 0, %s37
      %s41 = sphi 0, %s38
      %s42 = sphi 0, %s39
      %s43 = sphi 0, %s40
      %s85 = sphi 0, %s87
      %s88 = sphi 0, %s85
      %s89 = sphi 0, %s88
      %s105 = sphi 0, %s89
      %s113 = sphi 0, %s115
      %s116 = sphi 0, %s113
      %s117 = sphi 0, %s116
      %s133 = sphi 0, %s117
      %s163 = sphi 0, %s165
      %s166 = sphi 0, %s163
      %s167 = sphi 0, %s166
      %s183 = sphi 0, %s167
      %s213 = sphi 0, %s215
      %s216 = sphi 0, %s213
      %s217 = sphi 0, %s216
      %s233 = sphi 0, %s217
      %s239 = sphi 0, %s241
      %s242 = sphi 0, %s239
      %s243 = sphi 0, %s242
      %s259 = sphi 0, %s243
      %s263 = sphi 0, %s263
      %s265 = sphi 0, %s263
      %s266 = sphi 0, %s265
      %s280 = sphi 0, %s266
      %s288 = sphi 0, %s290
      %s291 = sphi 0, %s288
      %s292 = sphi 0, %s291
      %s308 = sphi 0, %s292
      %s314 = sphi 0, %s316
      %s317 = sphi 0, %s314
      %s318 = sphi 0, %s317
      %s334 = sphi 0, %s318
      %s340 = sphi 0, %s342
      %s343 = sphi 0, %s340
      %s344 = sphi 0, %s343
      %s360 = sphi 0, %s344
    $region4: #{tpu_custom_call.1} parent=1 // loop_header_branch
      %31 = sbr.rel (%p29) target = $region8
    $region5: #{tpu_custom_call.1} parent=1 // loop_body
      %s33 = ssub.s32 %s28, 1
      %s34 = ssub.s32 %s28, 2
      %s44 = sadd.s32 1, %s37
      %p45 = scmp.ge.s32.totalorder %s44, 2
      %s46 = scalar_select %p45, 0, %s44
      %s47 = sadd.s32 1, %s36
      %s48 = scalar_select %p45, %s47, %s36
      %p49 = scmp.ge.s32.totalorder %s48, 2
      %s50 = scalar_select %p49, 0, %s48
      %s51 = sadd.s32 1, %s35
      %s52 = scalar_select %p49, %s51, %s35
      %p53 = scmp.ge.s32.totalorder %s52, 4
      %s54 = scalar_select %p53, 0, %s52
      %p55 = scmp.lt.s32.totalorder %s35, 0
      %s56 = ssub.s32 0, %s35
      %s57 = scalar_select %p55, %s56, %s35
      %s58 = sand.u32 %s57, 1
      %s59 = ssub.s32 0, %s58
      %s60 = scalar_select %p55, %s59, %s58
      %p61 = scmp.ne.s32.totalorder %s60, 0
      %p62 = scmp.lt.s32.totalorder %s60, 0
      %p63 = pnand %p62, %p61
      %p64 = pneg %p63
      %s65 = sadd.s32 %s60, 2
      %s66 = scalar_select %p64, %s65, %s60
      %p67 = scmp.lt.s32.totalorder %s54, 0
      %s68 = ssub.s32 0, %s54
      %s69 = scalar_select %p67, %s68, %s54
      %s70 = sand.u32 %s69, 1
      %s71 = ssub.s32 0, %s70
      %s72 = scalar_select %p67, %s71, %s70
      %p73 = scmp.ne.s32.totalorder %s72, 0
      %p74 = scmp.lt.s32.totalorder %s72, 0
      %p75 = pnand %p74, %p73
      %p76 = pneg %p75
      %s77 = sadd.s32 %s72, 2
      %s78 = scalar_select %p76, %s77, %s72
      %s79 = ssub.s32 %s66, %s78
      %s80 = ssub.s32 %s36, %s50
      %s81 = sor.u32 %s79, %s80
      %s82 = ssub.s32 %s37, %s46
      %s83 = sor.u32 %s81, %s82
      %p84 = scmp.eq.s32.totalorder %s83, 0
      %s86 = sadd.s32 %s85, 1
      %s87 = scalar_select %p84, %s85, %s86
      %p90 = pneg %p84
      %p91 = scmp.eq.s32.totalorder %s28, 15
      %p92 = por %p90, %p91
      %p93 = scmp.ne.s32.totalorder %s85, %s88
      %p94 = scmp.eq.s32.totalorder %s28, 0
      %p95 = por %p93, %p94
      %p96 = scmp.ne.s32.totalorder %s85, %s88
      %p97 = scmp.eq.s32.totalorder %s33, 15
      %p98 = por %p96, %p97
      %p99 = scmp.ne.s32.totalorder %s88, %s89
      %p100 = scmp.eq.s32.totalorder %s33, 0
      %p101 = por %p99, %p100
      %p102 = scmp.ne.s32.totalorder %s88, %s89
      %p103 = scmp.eq.s32.totalorder %s34, 15
      %p104 = por %p102, %p103
      %p106 = scmp.ne.s32.totalorder %s89, %s105
      %p107 = scmp.eq.s32.totalorder %s34, 0
      %p108 = por %p106, %p107
      %s109 = ssub.s32 %s35, %s54
      %s110 = ssub.s32 %s37, %s46
      %s111 = sor.u32 %s109, %s110
      %p112 = scmp.eq.s32.totalorder %s111, 0
      %s114 = sadd.s32 %s113, 1
      %s115 = scalar_select %p112, %s113, %s114
      %p118 = pneg %p112
      %p119 = scmp.eq.s32.totalorder %s28, 15
      %p120 = por %p118, %p119
      %p121 = scmp.ne.s32.totalorder %s113, %s116
      %p122 = scmp.eq.s32.totalorder %s28, 0
      %p123 = por %p121, %p122
      %p124 = scmp.ne.s32.totalorder %s113, %s116
      %p125 = scmp.eq.s32.totalorder %s33, 15
      %p126 = por %p124, %p125
      %p127 = scmp.ne.s32.totalorder %s116, %s117
      %p128 = scmp.eq.s32.totalorder %s33, 0
      %p129 = por %p127, %p128
      %p130 = scmp.ne.s32.totalorder %s116, %s117
      %p131 = scmp.eq.s32.totalorder %s34, 15
      %p132 = por %p130, %p131
      %p134 = scmp.ne.s32.totalorder %s117, %s133
      %p135 = scmp.eq.s32.totalorder %s34, 0
      %p136 = por %p134, %p135
      %p137 = scmp.lt.s32.totalorder %s35, 0
      %s138 = ssub.s32 0, %s35
      %s139 = scalar_select %p137, %s138, %s35
      %s140 = sand.u32 %s139, 1
      %s141 = ssub.s32 0, %s140
      %s142 = scalar_select %p137, %s141, %s140
      %p143 = scmp.ne.s32.totalorder %s142, 0
      %p144 = scmp.lt.s32.totalorder %s142, 0
      %p145 = pnand %p144, %p143
      %p146 = pneg %p145
      %s147 = sadd.s32 %s142, 2
      %s148 = scalar_select %p146, %s147, %s142
      %p149 = scmp.lt.s32.totalorder %s54, 0
      %s150 = ssub.s32 0, %s54
      %s151 = scalar_select %p149, %s150, %s54
      %s152 = sand.u32 %s151, 1
      %s153 = ssub.s32 0, %s152
      %s154 = scalar_select %p149, %s153, %s152
      %p155 = scmp.ne.s32.totalorder %s154, 0
      %p156 = scmp.lt.s32.totalorder %s154, 0
      %p157 = pnand %p156, %p155
      %p158 = pneg %p157
      %s159 = sadd.s32 %s154, 2
      %s160 = scalar_select %p158, %s159, %s154
      %s161 = ssub.s32 %s148, %s160
      %p162 = scmp.eq.s32.totalorder %s161, 0
      %s164 = sadd.s32 %s163, 1
      %s165 = scalar_select %p162, %s163, %s164
      %p168 = pneg %p162
      %p169 = scmp.eq.s32.totalorder %s28, 15
      %p170 = por %p168, %p169
      %p171 = scmp.ne.s32.totalorder %s163, %s166
      %p172 = scmp.eq.s32.totalorder %s28, 0
      %p173 = por %p171, %p172
      %p174 = scmp.ne.s32.totalorder %s163, %s166
      %p175 = scmp.eq.s32.totalorder %s33, 15
      %p176 = por %p174, %p175
      %p177 = scmp.ne.s32.totalorder %s166, %s167
      %p178 = scmp.eq.s32.totalorder %s33, 0
      %p179 = por %p177, %p178
      %p180 = scmp.ne.s32.totalorder %s166, %s167
      %p181 = scmp.eq.s32.totalorder %s34, 15
      %p182 = por %p180, %p181
      %p184 = scmp.ne.s32.totalorder %s167, %s183
      %p185 = scmp.eq.s32.totalorder %s34, 0
      %p186 = por %p184, %p185
      %p187 = scmp.lt.s32.totalorder %s35, 0
      %s188 = ssub.s32 0, %s35
      %s189 = scalar_select %p187, %s188, %s35
      %s190 = sand.u32 %s189, 1
      %s191 = ssub.s32 0, %s190
      %s192 = scalar_select %p187, %s191, %s190
      %p193 = scmp.ne.s32.totalorder %s192, 0
      %p194 = scmp.lt.s32.totalorder %s192, 0
      %p195 = pnand %p194, %p193
      %p196 = pneg %p195
      %s197 = sadd.s32 %s192, 2
      %s198 = scalar_select %p196, %s197, %s192
      %p199 = scmp.lt.s32.totalorder %s54, 0
      %s200 = ssub.s32 0, %s54
      %s201 = scalar_select %p199, %s200, %s54
      %s202 = sand.u32 %s201, 1
      %s203 = ssub.s32 0, %s202
      %s204 = scalar_select %p199, %s203, %s202
      %p205 = scmp.ne.s32.totalorder %s204, 0
      %p206 = scmp.lt.s32.totalorder %s204, 0
      %p207 = pnand %p206, %p205
      %p208 = pneg %p207
      %s209 = sadd.s32 %s204, 2
      %s210 = scalar_select %p208, %s209, %s204
      %s211 = ssub.s32 %s198, %s210
      %p212 = scmp.eq.s32.totalorder %s211, 0
      %s214 = sadd.s32 %s213, 1
      %s215 = scalar_select %p212, %s213, %s214
      %p218 = pneg %p212
      %p219 = scmp.eq.s32.totalorder %s28, 15
      %p220 = por %p218, %p219
      %p221 = scmp.ne.s32.totalorder %s213, %s216
      %p222 = scmp.eq.s32.totalorder %s28, 0
      %p223 = por %p221, %p222
      %p224 = scmp.ne.s32.totalorder %s213, %s216
      %p225 = scmp.eq.s32.totalorder %s33, 15
      %p226 = por %p224, %p225
      %p227 = scmp.ne.s32.totalorder %s216, %s217
      %p228 = scmp.eq.s32.totalorder %s33, 0
      %p229 = por %p227, %p228
      %p230 = scmp.ne.s32.totalorder %s216, %s217
      %p231 = scmp.eq.s32.totalorder %s34, 15
      %p232 = por %p230, %p231
      %p234 = scmp.ne.s32.totalorder %s217, %s233
      %p235 = scmp.eq.s32.totalorder %s34, 0
      %p236 = por %p234, %p235
      %s237 = ssub.s32 %s36, %s50
      %p238 = scmp.eq.s32.totalorder %s237, 0
      %s240 = sadd.s32 %s239, 1
      %s241 = scalar_select %p238, %s239, %s240
      %p244 = pneg %p238
      %p245 = scmp.eq.s32.totalorder %s28, 15
      %p246 = por %p244, %p245
      %p247 = scmp.ne.s32.totalorder %s239, %s242
      %p248 = scmp.eq.s32.totalorder %s28, 0
      %p249 = por %p247, %p248
      %p250 = scmp.ne.s32.totalorder %s239, %s242
      %p251 = scmp.eq.s32.totalorder %s33, 15
      %p252 = por %p250, %p251
      %p253 = scmp.ne.s32.totalorder %s242, %s243
      %p254 = scmp.eq.s32.totalorder %s33, 0
      %p255 = por %p253, %p254
      %p256 = scmp.ne.s32.totalorder %s242, %s243
      %p257 = scmp.eq.s32.totalorder %s34, 15
      %p258 = por %p256, %p257
      %p260 = scmp.ne.s32.totalorder %s243, %s259
      %p261 = scmp.eq.s32.totalorder %s34, 0
      %p262 = por %p260, %p261
      %s264 = sadd.s32 %s263, 1
      %p267 = scmp.eq.s32.totalorder %s28, 15
      %p268 = scmp.ne.s32.totalorder %s263, %s265
      %p269 = scmp.eq.s32.totalorder %s28, 0
      %p270 = por %p268, %p269
      %p271 = scmp.ne.s32.totalorder %s263, %s265
      %p272 = scmp.eq.s32.totalorder %s33, 15
      %p273 = por %p271, %p272
      %p274 = scmp.ne.s32.totalorder %s265, %s266
      %p275 = scmp.eq.s32.totalorder %s33, 0
      %p276 = por %p274, %p275
      %p277 = scmp.ne.s32.totalorder %s265, %s266
      %p278 = scmp.eq.s32.totalorder %s34, 15
      %p279 = por %p277, %p278
      %p281 = scmp.ne.s32.totalorder %s266, %s280
      %p282 = scmp.eq.s32.totalorder %s34, 0
      %p283 = por %p281, %p282
      %s284 = ssub.s32 %s35, %s54
      %s285 = ssub.s32 %s36, %s50
      %s286 = sor.u32 %s284, %s285
      %p287 = scmp.eq.s32.totalorder %s286, 0
      %s289 = sadd.s32 %s288, 1
      %s290 = scalar_select %p287, %s288, %s289
      %p293 = pneg %p287
      %p294 = scmp.eq.s32.totalorder %s28, 15
      %p295 = por %p293, %p294
      %p296 = scmp.ne.s32.totalorder %s288, %s291
      %p297 = scmp.eq.s32.totalorder %s28, 0
      %p298 = por %p296, %p297
      %p299 = scmp.ne.s32.totalorder %s288, %s291
      %p300 = scmp.eq.s32.totalorder %s33, 15
      %p301 = por %p299, %p300
      %p302 = scmp.ne.s32.totalorder %s291, %s292
      %p303 = scmp.eq.s32.totalorder %s33, 0
      %p304 = por %p302, %p303
      %p305 = scmp.ne.s32.totalorder %s291, %s292
      %p306 = scmp.eq.s32.totalorder %s34, 15
      %p307 = por %p305, %p306
      %p309 = scmp.ne.s32.totalorder %s292, %s308
      %p310 = scmp.eq.s32.totalorder %s34, 0
      %p311 = por %p309, %p310
      %s312 = ssub.s32 %s35, %s54
      %p313 = scmp.eq.s32.totalorder %s312, 0
      %s315 = sadd.s32 %s314, 1
      %s316 = scalar_select %p313, %s314, %s315
      %p319 = pneg %p313
      %p320 = scmp.eq.s32.totalorder %s28, 15
      %p321 = por %p319, %p320
      %p322 = scmp.ne.s32.totalorder %s314, %s317
      %p323 = scmp.eq.s32.totalorder %s28, 0
      %p324 = por %p322, %p323
      %p325 = scmp.ne.s32.totalorder %s314, %s317
      %p326 = scmp.eq.s32.totalorder %s33, 15
      %p327 = por %p325, %p326
      %p328 = scmp.ne.s32.totalorder %s317, %s318
      %p329 = scmp.eq.s32.totalorder %s33, 0
      %p330 = por %p328, %p329
      %p331 = scmp.ne.s32.totalorder %s317, %s318
      %p332 = scmp.eq.s32.totalorder %s34, 15
      %p333 = por %p331, %p332
      %p335 = scmp.ne.s32.totalorder %s318, %s334
      %p336 = scmp.eq.s32.totalorder %s34, 0
      %p337 = por %p335, %p336
      %s338 = ssub.s32 %s35, %s54
      %p339 = scmp.eq.s32.totalorder %s338, 0
      %s341 = sadd.s32 %s340, 1
      %s342 = scalar_select %p339, %s340, %s341
      %p345 = pneg %p339
      %p346 = scmp.eq.s32.totalorder %s28, 15
      %p347 = por %p345, %p346
      %p348 = scmp.ne.s32.totalorder %s340, %s343
      %p349 = scmp.eq.s32.totalorder %s28, 0
      %p350 = por %p348, %p349
      %p351 = scmp.ne.s32.totalorder %s340, %s343
      %p352 = scmp.eq.s32.totalorder %s33, 15
      %p353 = por %p351, %p352
      %p354 = scmp.ne.s32.totalorder %s343, %s344
      %p355 = scmp.eq.s32.totalorder %s33, 0
      %p356 = por %p354, %p355
      %p357 = scmp.ne.s32.totalorder %s343, %s344
      %p358 = scmp.eq.s32.totalorder %s34, 15
      %p359 = por %p357, %p358
      %p361 = scmp.ne.s32.totalorder %s344, %s360
      %p362 = scmp.eq.s32.totalorder %s34, 0
      %p363 = por %p361, %p362
      %p364 = scmp.le.s32.totalorder 1, %s28
      %p365 = scmp.lt.s32.totalorder %s28, 17
      %p366 = pnand %p364, %p365
      %p367 = pneg %p366
      // Predicated region
      $region9: #{tpu_custom_call.1} parent=5 // pred_check
        _
      $region10: #{tpu_custom_call.1} parent=5 // pred_check_branch
        %369 = sbr.rel (%p366) target = $region12
      $region11: #{tpu_custom_call.1} parent=5 // pred_region
        %s370 = ssub.s32 %s28, 1
        // Predicated region
        $region13: #{tpu_custom_call.1} parent=11 // pred_check
          %p371 = pneg %p276
        $region14: #{tpu_custom_call.1} parent=11 // pred_check_branch
          %373 = sbr.rel (%p371) target = $region16
        $region15: #{tpu_custom_call.1} parent=11 // pred_region
          %s375 = ssub.s32 16, 16
          %376 = vsyncadd [#allocation6], %s375
          %s378 = sshll.u32 %s5, 4
          %s379 = int_to_ptr.vmem [resolvable:$true] %s378
          %381 = dma.vmem_to_smem %s379, 16, [#allocation9], [#allocation6]
        $region16: #{tpu_custom_call.1} parent=11 // pred_fallthru
          _
      $region12: #{tpu_custom_call.1} parent=5 // pred_fallthru
        _
      %p382 = scmp.lt.s32.totalorder %s28, 16
      // Predicated region
      $region17: #{tpu_custom_call.1} parent=5 // pred_check
        %p383 = pneg %p382
      $region18: #{tpu_custom_call.1} parent=5 // pred_check_branch
        %385 = sbr.rel (%p383) target = $region20
      $region19: #{tpu_custom_call.1} parent=5 // pred_region
        // Predicated region
        $region21: #{tpu_custom_call.1} parent=19 // pred_check
          %p386 = pneg %p95
        $region22: #{tpu_custom_call.1} parent=19 // pred_check_branch
          %388 = sbr.rel (%p386) target = $region24
        $region23: #{tpu_custom_call.1} parent=19 // pred_region
          %s389 = sand.u32 %s85, 1
          %s390 = scalar_lea.sflag [#allocation4], %s389
          %s391 = sand.u32 %s85, 1
          %s392 = smul.addr %s391, 64
          %s393 = scalar_lea.vmem [#allocation3], %s392
          %p394 = scmp.lt.s32.totalorder %s35, 0
          %s395 = ssub.s32 0, %s35
          %s396 = scalar_select %p394, %s395, %s35
          %s397 = sand.u32 %s396, 1
          %s398 = ssub.s32 0, %s397
          %s399 = scalar_select %p394, %s398, %s397
          %p400 = scmp.ne.s32.totalorder %s399, 0
          %p401 = scmp.lt.s32.totalorder %s399, 0
          %p402 = pnand %p401, %p400
          %p403 = pneg %p402
          %s404 = sadd.s32 %s399, 2
          %s405 = scalar_select %p403, %s404, %s399
          %s406 = smul.u32 16, %s36
          %s408 = ssub.s32 1024, 1024
          %409 = vsyncadd %s390, %s408
          %s410 = smul.addr %s406, 2
          %s411 = sadd.s32 %s37, %s410
          %s412 = smul.addr %s405, 64
          %s413 = sadd.s32 %s411, %s412
          %s414 = smul.addr %s413, 64
          %s415 = scalar_lea.hbm %s0, %s414
          %s416 = sshll.u32 %s393, 4
          %s417 = int_to_ptr.vmem [resolvable:$true] %s416
          %422 = dma.hbm_to_vmem [thread:$0]  %s415, 1024, %s417, %s390, 128, 64, 4
        $region24: #{tpu_custom_call.1} parent=19 // pred_fallthru
          _
        // Predicated region
        $region25: #{tpu_custom_call.1} parent=19 // pred_check
          %p423 = pneg %p123
        $region26: #{tpu_custom_call.1} parent=19 // pred_check_branch
          %425 = sbr.rel (%p423) target = $region28
        $region27: #{tpu_custom_call.1} parent=19 // pred_region
          %s426 = sand.u32 %s113, 1
          %s427 = scalar_lea.sflag [#allocation8], %s426
          %s428 = sand.u32 %s113, 1
          %s429 = smul.addr %s428, 64
          %s430 = scalar_lea.vmem [#allocation7], %s429
          %s431 = smul.u32 16, %s37
          %s433 = ssub.s32 1024, 1024
          %434 = vsyncadd %s427, %s433
          %s435 = smul.addr %s35, 32
          %s436 = sadd.s32 %s431, %s435
          %s437 = smul.addr %s436, 64
          %s438 = scalar_lea.hbm %s1, %s437
          %s439 = sshll.u32 %s430, 4
          %s440 = int_to_ptr.vmem [resolvable:$true] %s439
          %445 = dma.hbm_to_vmem [thread:$0]  %s438, 1024, %s440, %s427, 64, 64, 4
        $region28: #{tpu_custom_call.1} parent=19 // pred_fallthru
          _
        // Predicated region
        $region29: #{tpu_custom_call.1} parent=19 // pred_check
          %p446 = pneg %p173
        $region30: #{tpu_custom_call.1} parent=19 // pred_check_branch
          %448 = sbr.rel (%p446) target = $region32
        $region31: #{tpu_custom_call.1} parent=19 // pred_region
          %p449 = scmp.lt.s32.totalorder %s35, 0
          %s450 = ssub.s32 0, %s35
          %s451 = scalar_select %p449, %s450, %s35
          %s452 = sand.u32 %s451, 1
          %s453 = ssub.s32 0, %s452
          %s454 = scalar_select %p449, %s453, %s452
          %p455 = scmp.ne.s32.totalorder %s454, 0
          %p456 = scmp.lt.s32.totalorder %s454, 0
          %p457 = pnand %p456, %p455
          %p458 = pneg %p457
          %s459 = sadd.s32 %s454, 2
          %s460 = scalar_select %p458, %s459, %s454
          %p461 = scmp.lt.s32.totalorder %s460, 1
          %s462 = scalar_select %p461, %s460, 1
          %s463 = smul.addr %s462, 16
          %s464 = smul.addr %s463, 8
          %s465 = scalar_lea.vmem %s2, %s464
          %p466 = scmp.lt.s32.totalorder %s35, 0
          %s467 = ssub.s32 0, %s35
          %s468 = scalar_select %p466, %s467, %s35
          %s469 = sand.u32 %s468, 1
          %s470 = ssub.s32 0, %s469
          %s471 = scalar_select %p466, %s470, %s469
          %p472 = scmp.ne.s32.totalorder %s471, 0
          %p473 = scmp.lt.s32.totalorder %s471, 0
          %p474 = pnand %p473, %p472
          %p475 = pneg %p474
          %s476 = sadd.s32 %s471, 2
          %s477 = scalar_select %p475, %s476, %s471
        $region32: #{tpu_custom_call.1} parent=19 // pred_fallthru
          _
        // Predicated region
        $region33: #{tpu_custom_call.1} parent=19 // pred_check
          %p478 = pneg %p223
        $region34: #{tpu_custom_call.1} parent=19 // pred_check_branch
          %480 = sbr.rel (%p478) target = $region36
        $region35: #{tpu_custom_call.1} parent=19 // pred_region
          %p481 = scmp.lt.s32.totalorder %s35, 0
          %s482 = ssub.s32 0, %s35
          %s483 = scalar_select %p481, %s482, %s35
          %s484 = sand.u32 %s483, 1
          %s485 = ssub.s32 0, %s484
          %s486 = scalar_select %p481, %s485, %s484
          %p487 = scmp.ne.s32.totalorder %s486, 0
          %p488 = scmp.lt.s32.totalorder %s486, 0
          %p489 = pnand %p488, %p487
          %p490 = pneg %p489
          %s491 = sadd.s32 %s486, 2
          %s492 = scalar_select %p490, %s491, %s486
          %p493 = scmp.lt.s32.totalorder %s492, 1
          %s494 = scalar_select %p493, %s492, 1
          %s495 = scalar_lea.vmem %s3, %s494
          %p496 = scmp.lt.s32.totalorder %s35, 0
          %s497 = ssub.s32 0, %s35
          %s498 = scalar_select %p496, %s497, %s35
          %s499 = sand.u32 %s498, 1
          %s500 = ssub.s32 0, %s499
          %s501 = scalar_select %p496, %s500, %s499
          %p502 = scmp.ne.s32.totalorder %s501, 0
          %p503 = scmp.lt.s32.totalorder %s501, 0
          %p504 = pnand %p503, %p502
          %p505 = pneg %p504
          %s506 = sadd.s32 %s501, 2
          %s507 = scalar_select %p505, %s506, %s501
        $region36: #{tpu_custom_call.1} parent=19 // pred_fallthru
          _
        // Predicated region
        $region37: #{tpu_custom_call.1} parent=19 // pred_check
          %p508 = pneg %p249
        $region38: #{tpu_custom_call.1} parent=19 // pred_check_branch
          %510 = sbr.rel (%p508) target = $region40
        $region39: #{tpu_custom_call.1} parent=19 // pred_region
          %s511 = smul.u32 16, %s36
          %p512 = scmp.lt.s32.totalorder %s511, 31
          %s513 = scalar_select %p512, %s511, 31
          %s514 = smul.addr %s513, 8
          %s515 = scalar_lea.vmem %s4, %s514
          %s516 = smul.u32 16, %s36
        $region40: #{tpu_custom_call.1} parent=19 // pred_fallthru
          _
      $region20: #{tpu_custom_call.1} parent=5 // pred_fallthru
        _
      %p517 = scmp.le.s32.totalorder 1, %s28
      %p518 = scmp.lt.s32.totalorder %s28, 17
      %p519 = pnand %p517, %p518
      %p520 = pneg %p519
      // Predicated region
      $region41: #{tpu_custom_call.1} parent=5 // pred_check
        _
      $region42: #{tpu_custom_call.1} parent=5 // pred_check_branch
        %522 = sbr.rel (%p519) target = $region44
      $region43: #{tpu_custom_call.1} parent=5 // pred_region
        %s523 = ssub.s32 %s28, 1
        %s524 = sand.u32 %s88, 1
        %s525 = scalar_lea.sflag [#allocation4], %s524
        %s526 = sand.u32 %s88, 1
        %s527 = smul.addr %s526, 64
        %s528 = scalar_lea.vmem [#allocation3], %s527
        // Predicated region
        $region45: #{tpu_custom_call.1} parent=43 // pred_check
          %p529 = pneg %p101
        $region46: #{tpu_custom_call.1} parent=43 // pred_check_branch
          %531 = sbr.rel (%p529) target = $region48
        $region47: #{tpu_custom_call.1} parent=43 // pred_region
          %532 = dma.done %s525, 1024
        $region48: #{tpu_custom_call.1} parent=43 // pred_fallthru
          _
        %s533 = sand.u32 %s116, 1
        %s534 = scalar_lea.sflag [#allocation8], %s533
        %s535 = sand.u32 %s116, 1
        %s536 = smul.addr %s535, 64
        %s537 = scalar_lea.vmem [#allocation7], %s536
        // Predicated region
        $region49: #{tpu_custom_call.1} parent=43 // pred_check
          %p538 = pneg %p129
        $region50: #{tpu_custom_call.1} parent=43 // pred_check_branch
          %540 = sbr.rel (%p538) target = $region52
        $region51: #{tpu_custom_call.1} parent=43 // pred_region
          %541 = dma.done %s534, 1024
        $region52: #{tpu_custom_call.1} parent=43 // pred_fallthru
          _
        // Predicated region
        $region53: #{tpu_custom_call.1} parent=43 // pred_check
          %p542 = pneg %p276
        $region54: #{tpu_custom_call.1} parent=43 // pred_check_branch
          %544 = sbr.rel (%p542) target = $region56
        $region55: #{tpu_custom_call.1} parent=43 // pred_region
          %545 = dma.done [#allocation6], 16
        $region56: #{tpu_custom_call.1} parent=43 // pred_fallthru
          _
        %546 = sfence
        %s547 = sand.u32 %s88, 1
        %s548 = scalar_lea.sflag [#allocation4], %s547
        %s549 = sand.u32 %s88, 1
        %s550 = smul.addr %s549, 64
        %s551 = scalar_lea.vmem [#allocation3], %s550
        %p552 = pneg %p101
        %p553 = pneg %p98
        %s554 = sand.u32 %s116, 1
        %s555 = scalar_lea.sflag [#allocation8], %s554
        %s556 = sand.u32 %s116, 1
        %s557 = smul.addr %s556, 64
        %s558 = scalar_lea.vmem [#allocation7], %s557
        %p559 = pneg %p129
        %p560 = pneg %p126
        %p561 = scmp.lt.s32.totalorder %s38, 0
        %s562 = ssub.s32 0, %s38
        %s563 = scalar_select %p561, %s562, %s38
        %s564 = sand.u32 %s563, 1
        %s565 = ssub.s32 0, %s564
        %s566 = scalar_select %p561, %s565, %s564
        %p567 = scmp.ne.s32.totalorder %s566, 0
        %p568 = scmp.lt.s32.totalorder %s566, 0
        %p569 = pnand %p568, %p567
        %p570 = pneg %p569
        %s571 = sadd.s32 %s566, 2
        %s572 = scalar_select %p570, %s571, %s566
        %p573 = scmp.lt.s32.totalorder %s572, 1
        %s574 = scalar_select %p573, %s572, 1
        %s575 = smul.addr %s574, 16
        %s576 = smul.addr %s575, 8
        %s577 = scalar_lea.vmem %s2, %s576
        %p578 = pneg %p179
        %p579 = pneg %p176
        %p580 = scmp.lt.s32.totalorder %s38, 0
        %s581 = ssub.s32 0, %s38
        %s582 = scalar_select %p580, %s581, %s38
        %s583 = sand.u32 %s582, 1
        %s584 = ssub.s32 0, %s583
        %s585 = scalar_select %p580, %s584, %s583
        %p586 = scmp.ne.s32.totalorder %s585, 0
        %p587 = scmp.lt.s32.totalorder %s585, 0
        %p588 = pnand %p587, %p586
        %p589 = pneg %p588
        %s590 = sadd.s32 %s585, 2
        %s591 = scalar_select %p589, %s590, %s585
        %p592 = scmp.lt.s32.totalorder %s591, 1
        %s593 = scalar_select %p592, %s591, 1
        %s594 = scalar_lea.vmem %s3, %s593
        %p595 = pneg %p229
        %p596 = pneg %p226
        %s597 = smul.u32 16, %s39
        %p598 = scmp.lt.s32.totalorder %s597, 31
        %s599 = scalar_select %p598, %s597, 31
        %s600 = smul.addr %s599, 8
        %s601 = scalar_lea.vmem %s4, %s600
        %p602 = pneg %p255
        %p603 = pneg %p252
        %p604 = pneg %p276
        %p605 = pneg %p273
        %p606 = pneg %p304
        %p607 = pneg %p301
        %s608 = sand.u32 %s291, 1
        %s609 = scalar_lea.sflag [#allocation5], %s608
        %s610 = sand.u32 %s291, 1
        %s611 = smul.addr %s610, 128
        %s612 = scalar_lea.vmem [#allocation10], %s611
        %p613 = pneg %p330
        %p614 = pneg %p327
        %s615 = sand.u32 %s33, 1
        %s616 = scalar_lea.sflag [#allocation12], %s615
        %s617 = sand.u32 %s317, 1
        %s618 = scalar_lea.vmem [#allocation11], %s617
        %p619 = pneg %p356
        %p620 = pneg %p353
        %s621 = sand.u32 %s33, 1
        %s622 = scalar_lea.sflag [#allocation12], %s621
        %s623 = sand.u32 %s343, 1
        %s624 = scalar_lea.vmem [#allocation13], %s623
        %p625 = scmp.lt.s32.totalorder %s38, 0
        %s626 = ssub.s32 0, %s38
        %s627 = scalar_select %p625, %s626, %s38
        %s628 = sand.u32 %s627, 1
        %s629 = ssub.s32 0, %s628
        %s630 = scalar_select %p625, %s629, %s628
        %p631 = scmp.ne.s32.totalorder %s630, 0
        %p632 = scmp.lt.s32.totalorder %s630, 0
        %p633 = pnand %p632, %p631
        %p634 = pneg %p633
        %s635 = sadd.s32 %s630, 2
        %s636 = scalar_select %p634, %s635, %s630
        %s637 = smul.u32 16, %s39
        %s638 = smul.u32 16, %s40
        %p639 = scmp.lt.s32.totalorder %s38, 0
        %s640 = ssub.s32 0, %s38
        %s641 = scalar_select %p639, %s640, %s38
        %s642 = sand.u32 %s641, 1
        %s643 = ssub.s32 0, %s642
        %s644 = scalar_select %p639, %s643, %s642
        %p645 = scmp.ne.s32.totalorder %s644, 0
        %p646 = scmp.lt.s32.totalorder %s644, 0
        %p647 = pnand %p646, %p645
        %p648 = pneg %p647
        %s649 = sadd.s32 %s644, 2
        %s650 = scalar_select %p648, %s649, %s644
        %p651 = scmp.lt.s32.totalorder %s650, 1
        %s652 = scalar_select %p651, %s650, 1
        %s653 = smul.addr %s652, 16
        %s654 = smul.addr %s653, 8
        %s655 = scalar_lea.vmem %s2, %s654
        %p656 = scmp.lt.s32.totalorder %s38, 0
        %s657 = ssub.s32 0, %s38
        %s658 = scalar_select %p656, %s657, %s38
        %s659 = sand.u32 %s658, 1
        %s660 = ssub.s32 0, %s659
        %s661 = scalar_select %p656, %s660, %s659
        %p662 = scmp.ne.s32.totalorder %s661, 0
        %p663 = scmp.lt.s32.totalorder %s661, 0
        %p664 = pnand %p663, %p662
        %p665 = pneg %p664
        %s666 = sadd.s32 %s661, 2
        %s667 = scalar_select %p665, %s666, %s661
        %p668 = scmp.lt.s32.totalorder %s38, 0
        %s669 = ssub.s32 0, %s38
        %s670 = scalar_select %p668, %s669, %s38
        %s671 = sand.u32 %s670, 1
        %s672 = ssub.s32 0, %s671
        %s673 = scalar_select %p668, %s672, %s671
        %p674 = scmp.ne.s32.totalorder %s673, 0
        %p675 = scmp.lt.s32.totalorder %s673, 0
        %p676 = pnand %p675, %p674
        %p677 = pneg %p676
        %s678 = sadd.s32 %s673, 2
        %s679 = scalar_select %p677, %s678, %s673
        %p680 = scmp.lt.s32.totalorder %s679, 1
        %s681 = scalar_select %p680, %s679, 1
        %s682 = scalar_lea.vmem %s3, %s681
        %p683 = scmp.lt.s32.totalorder %s38, 0
        %s684 = ssub.s32 0, %s38
        %s685 = scalar_select %p683, %s684, %s38
        %s686 = sand.u32 %s685, 1
        %s687 = ssub.s32 0, %s686
        %s688 = scalar_select %p683, %s687, %s686
        %p689 = scmp.ne.s32.totalorder %s688, 0
        %p690 = scmp.lt.s32.totalorder %s688, 0
        %p691 = pnand %p690, %p689
        %p692 = pneg %p691
        %s693 = sadd.s32 %s688, 2
        %s694 = scalar_select %p692, %s693, %s688
        %s695 = smul.u32 16, %s39
        %p696 = scmp.lt.s32.totalorder %s695, 31
        %s697 = scalar_select %p696, %s695, 31
        %s698 = smul.addr %s697, 8
        %s699 = scalar_lea.vmem %s4, %s698
        %s700 = smul.u32 16, %s39
        %s701 = smul.u32 16, %s39
        %p703 = scmp.eq.s32.totalorder %s40, 0
        // Predicated region
        $region57: #{tpu_custom_call.1} parent=43 // pred_check
          %p704 = pneg %p703
        $region58: #{tpu_custom_call.1} parent=43 // pred_check_branch
          %706 = sbr.rel (%p704) target = $region60
        $region59: #{tpu_custom_call.1} parent=43 // pred_region
          %707 = vst [vmem:[#allocation2] sm:$0xff] 0.0
          %708 = vst [vmem:[#allocation2 + $0x8] sm:$0xff] 0.0
          %709 = vst [vmem:[#allocation2 + $0x10] sm:$0xff] 0.0
          %710 = vst [vmem:[#allocation2 + $0x18] sm:$0xff] 0.0
          %711 = vst [vmem:[#allocation2 + $0x20] sm:$0xff] 0.0
          %712 = vst [vmem:[#allocation2 + $0x28] sm:$0xff] 0.0
          %713 = vst [vmem:[#allocation2 + $0x30] sm:$0xff] 0.0
          %714 = vst [vmem:[#allocation2 + $0x38] sm:$0xff] 0.0
          %715 = vst [vmem:[#allocation2 + $0x40] sm:$0xff] 0.0
          %716 = vst [vmem:[#allocation2 + $0x48] sm:$0xff] 0.0
          %717 = vst [vmem:[#allocation2 + $0x50] sm:$0xff] 0.0
          %718 = vst [vmem:[#allocation2 + $0x58] sm:$0xff] 0.0
          %719 = vst [vmem:[#allocation2 + $0x60] sm:$0xff] 0.0
          %720 = vst [vmem:[#allocation2 + $0x68] sm:$0xff] 0.0
          %721 = vst [vmem:[#allocation2 + $0x70] sm:$0xff] 0.0
          %722 = vst [vmem:[#allocation2 + $0x78] sm:$0xff] 0.0
        $region60: #{tpu_custom_call.1} parent=43 // pred_fallthru
          _
        %p723 = scmp.eq.s32.totalorder %s39, 0
        %p724 = pnand %p723, %p703
        %p725 = pneg %p724
        // Predicated region
        $region61: #{tpu_custom_call.1} parent=43 // pred_check
          _
        $region62: #{tpu_custom_call.1} parent=43 // pred_check_branch
          %727 = sbr.rel (%p724) target = $region64
        $region63: #{tpu_custom_call.1} parent=43 // pred_region
          %728 = vst [vmem:[%s618] sm:$0x1] 0.0
          %729 = vst [vmem:[%s624] sm:$0x1] 0.0
        $region64: #{tpu_custom_call.1} parent=43 // pred_fallthru
          _
        %v730 = vld [vmem:[#allocation2] sm:$0xff]
        %v731 = vld [vmem:[#allocation2 + $0x8] sm:$0xff]
        %v732 = vld [vmem:[#allocation2 + $0x10] sm:$0xff]
        %v733 = vld [vmem:[#allocation2 + $0x18] sm:$0xff]
        %v734 = vld [vmem:[#allocation2 + $0x20] sm:$0xff]
        %v735 = vld [vmem:[#allocation2 + $0x28] sm:$0xff]
        %v736 = vld [vmem:[#allocation2 + $0x30] sm:$0xff]
        %v737 = vld [vmem:[#allocation2 + $0x38] sm:$0xff]
        %v738 = vld [vmem:[#allocation2 + $0x40] sm:$0xff]
        %v739 = vld [vmem:[#allocation2 + $0x48] sm:$0xff]
        %v740 = vld [vmem:[#allocation2 + $0x50] sm:$0xff]
        %v741 = vld [vmem:[#allocation2 + $0x58] sm:$0xff]
        %v742 = vld [vmem:[#allocation2 + $0x60] sm:$0xff]
        %v743 = vld [vmem:[#allocation2 + $0x68] sm:$0xff]
        %v744 = vld [vmem:[#allocation2 + $0x70] sm:$0xff]
        %v745 = vld [vmem:[#allocation2 + $0x78] sm:$0xff]
        %v746 = vld [vmem:[%s528] sm:$0xf]
        %v747 = vld [vmem:[%s528 + $0x4] sm:$0xf]
        %v748 = vld [vmem:[%s528 + $0x8] sm:$0xf]
        %v749 = vld [vmem:[%s528 + $0xc] sm:$0xf]
        %v750 = vld [vmem:[%s528 + $0x10] sm:$0xf]
        %v751 = vld [vmem:[%s528 + $0x14] sm:$0xf]
        %v752 = vld [vmem:[%s528 + $0x18] sm:$0xf]
        %v753 = vld [vmem:[%s528 + $0x1c] sm:$0xf]
        %v754 = vld [vmem:[%s528 + $0x20] sm:$0xf]
        %v755 = vld [vmem:[%s528 + $0x24] sm:$0xf]
        %v756 = vld [vmem:[%s528 + $0x28] sm:$0xf]
        %v757 = vld [vmem:[%s528 + $0x2c] sm:$0xf]
        %v758 = vld [vmem:[%s528 + $0x30] sm:$0xf]
        %v759 = vld [vmem:[%s528 + $0x34] sm:$0xf]
        %v760 = vld [vmem:[%s528 + $0x38] sm:$0xf]
        %v761 = vld [vmem:[%s528 + $0x3c] sm:$0xf]
        %v762 = vld [vmem:[%s537] sm:$0xf]
        %v763 = vld [vmem:[%s537 + $0x4] sm:$0xf]
        %v764 = vld [vmem:[%s537 + $0x8] sm:$0xf]
        %v765 = vld [vmem:[%s537 + $0xc] sm:$0xf]
        %v766 = vld [vmem:[%s537 + $0x10] sm:$0xf]
        %v767 = vld [vmem:[%s537 + $0x14] sm:$0xf]
        %v768 = vld [vmem:[%s537 + $0x18] sm:$0xf]
        %v769 = vld [vmem:[%s537 + $0x1c] sm:$0xf]
        %v770 = vld [vmem:[%s537 + $0x20] sm:$0xf]
        %v771 = vld [vmem:[%s537 + $0x24] sm:$0xf]
        %v772 = vld [vmem:[%s537 + $0x28] sm:$0xf]
        %v773 = vld [vmem:[%s537 + $0x2c] sm:$0xf]
        %v774 = vld [vmem:[%s537 + $0x30] sm:$0xf]
        %v775 = vld [vmem:[%s537 + $0x34] sm:$0xf]
        %v776 = vld [vmem:[%s537 + $0x38] sm:$0xf]
        %v777 = vld [vmem:[%s537 + $0x3c] sm:$0xf]
        %v794 = vunpack.c.l.b16 %v746
        %v795 = vunpack.c.l.b16 %v747
        %v796 = vunpack.c.l.b16 %v748
        %v797 = vunpack.c.l.b16 %v749
        %v798 = vunpack.c.l.b16 %v750
        %v799 = vunpack.c.l.b16 %v751
        %v800 = vunpack.c.l.b16 %v752
        %v801 = vunpack.c.l.b16 %v753
        %v802 = vunpack.c.l.b16 %v754
        %v803 = vunpack.c.l.b16 %v755
        %v804 = vunpack.c.l.b16 %v756
        %v805 = vunpack.c.l.b16 %v757
        %v806 = vunpack.c.l.b16 %v758
        %v807 = vunpack.c.l.b16 %v759
        %v808 = vunpack.c.l.b16 %v760
        %v809 = vunpack.c.l.b16 %v761
        %v810 = vpack.c.b16 %v795, %v794
        %v811 = vpack.c.b16 %v797, %v796
        %v812 = vpack.c.b16 %v799, %v798
        %v813 = vpack.c.b16 %v801, %v800
        %v814 = vpack.c.b16 %v803, %v802
        %v815 = vpack.c.b16 %v805, %v804
        %v816 = vpack.c.b16 %v807, %v806
        %v817 = vpack.c.b16 %v809, %v808
        %v842 = vunpack.c.l.b16 %v762
        %v843 = vunpack.c.l.b16 %v763
        %v844 = vunpack.c.l.b16 %v764
        %v845 = vunpack.c.l.b16 %v765
        %v846 = vunpack.c.l.b16 %v766
        %v847 = vunpack.c.l.b16 %v767
        %v848 = vunpack.c.l.b16 %v768
        %v849 = vunpack.c.l.b16 %v769
        %v850 = vunpack.c.l.b16 %v770
        %v851 = vunpack.c.l.b16 %v771
        %v852 = vunpack.c.l.b16 %v772
        %v853 = vunpack.c.l.b16 %v773
        %v854 = vunpack.c.l.b16 %v774
        %v855 = vunpack.c.l.b16 %v775
        %v856 = vunpack.c.l.b16 %v776
        %v857 = vunpack.c.l.b16 %v777
        %v858 = vpack.c.b16 %v843, %v842
        %v859 = vpack.c.b16 %v845, %v844
        %v860 = vpack.c.b16 %v847, %v846
        %v861 = vpack.c.b16 %v849, %v848
        %v862 = vpack.c.b16 %v851, %v850
        %v863 = vpack.c.b16 %v853, %v852
        %v864 = vpack.c.b16 %v855, %v854
        %v865 = vpack.c.b16 %v857, %v856
        %874 = vmatprep.subr.bf16.mxu0 0
        %875 = vmatpush1.bf16.msra.mxu0 %v858
        %876 = vmatprep.subr.bf16.mxu0 0
        %877 = vmatpush1.bf16.msra.mxu0 %v859
        %878 = vmatprep.subr.bf16.mxu0 0
        %879 = vmatpush1.bf16.msra.mxu0 %v860
        %880 = vmatprep.subr.bf16.mxu0 0
        %881 = vmatpush1.bf16.msra.mxu0 %v861
        %882 = vmatprep.subr.bf16.mxu0 0
        %883 = vmatpush1.bf16.msra.mxu0 %v862
        %884 = vmatprep.subr.bf16.mxu0 0
        %885 = vmatpush1.bf16.msra.mxu0 %v863
        %886 = vmatprep.subr.bf16.mxu0 0
        %887 = vmatpush1.bf16.msra.mxu0 %v864
        %888 = vmatprep.subr.bf16.mxu0 0
        %889 = vmatpush1.bf16.msra.mxu0 %v865
        %890 = vmatprep.subr.bf16.mxu0 0
        %891 = vmatpush1.bf16.msra.mxu0 0
        %892 = vmatprep.subr.bf16.mxu0 0
        %893 = vmatpush1.bf16.msra.mxu0 0
        %894 = vmatprep.subr.bf16.mxu0 0
        %895 = vmatpush1.bf16.msra.mxu0 0
        %896 = vmatprep.subr.bf16.mxu0 0
        %897 = vmatpush1.bf16.msra.mxu0 0
        %898 = vmatprep.subr.bf16.mxu0 0
        %899 = vmatpush1.bf16.msra.mxu0 0
        %900 = vmatprep.subr.bf16.mxu0 0
        %901 = vmatpush1.bf16.msra.mxu0 0
        %902 = vmatprep.subr.bf16.mxu0 0
        %903 = vmatpush1.bf16.msra.mxu0 0
        %904 = vmatprep.subr.bf16.mxu0 0
        %905 = vmatpush1.bf16.msra.mxu0 0
        %906 = vmatprep.mubr.bf16.mxu0 0
        %907 = vmatmul.mubr.bf16.gmra.mrb[0].mxu0 %v810
        %v908 = vpop.f32.mrb[0].mxu0
        %v909 = vadd.f32 0.0, %v908
        %v910 = vpop.f32.mrb[0].mxu0
        %v911 = vpop.f32.mrb[0].mxu0
        %v912 = vadd.f32 0.0, %v911
        %v913 = vpop.f32.mrb[0].mxu0
        %914 = vmatprep.mubr.bf16.mxu0 0
        %915 = vmatmul.mubr.bf16.gmra.mrb[0].mxu0 %v811
        %v916 = vpop.f32.mrb[0].mxu0
        %v917 = vadd.f32 0.0, %v916
        %v918 = vpop.f32.mrb[0].mxu0
        %v919 = vpop.f32.mrb[0].mxu0
        %v920 = vadd.f32 0.0, %v919
        %v921 = vpop.f32.mrb[0].mxu0
        %922 = vmatprep.mubr.bf16.mxu0 0
        %923 = vmatmul.mubr.bf16.gmra.mrb[0].mxu0 %v812
        %v924 = vpop.f32.mrb[0].mxu0
        %v925 = vadd.f32 0.0, %v924
        %v926 = vpop.f32.mrb[0].mxu0
        %v927 = vpop.f32.mrb[0].mxu0
        %v928 = vadd.f32 0.0, %v927
        %v929 = vpop.f32.mrb[0].mxu0
        %930 = vmatprep.mubr.bf16.mxu0 0
        %931 = vmatmul.mubr.bf16.gmra.mrb[0].mxu0 %v813
        %v932 = vpop.f32.mrb[0].mxu0
        %v933 = vadd.f32 0.0, %v932
        %v934 = vpop.f32.mrb[0].mxu0
        %v935 = vpop.f32.mrb[0].mxu0
        %v936 = vadd.f32 0.0, %v935
        %v937 = vpop.f32.mrb[0].mxu0
        %938 = vmatprep.mubr.bf16.mxu0 0
        %939 = vmatmul.mubr.bf16.gmra.mrb[0].mxu0 %v814
        %v940 = vpop.f32.mrb[0].mxu0
        %v941 = vadd.f32 0.0, %v940
        %v942 = vpop.f32.mrb[0].mxu0
        %v943 = vpop.f32.mrb[0].mxu0
        %v944 = vadd.f32 0.0, %v943
        %v945 = vpop.f32.mrb[0].mxu0
        %946 = vmatprep.mubr.bf16.mxu0 0
        %947 = vmatmul.mubr.bf16.gmra.mrb[0].mxu0 %v815
        %v948 = vpop.f32.mrb[0].mxu0
        %v949 = vadd.f32 0.0, %v948
        %v950 = vpop.f32.mrb[0].mxu0
        %v951 = vpop.f32.mrb[0].mxu0
        %v952 = vadd.f32 0.0, %v951
        %v953 = vpop.f32.mrb[0].mxu0
        %954 = vmatprep.mubr.bf16.mxu0 0
        %955 = vmatmul.mubr.bf16.gmra.mrb[0].mxu0 %v816
        %v956 = vpop.f32.mrb[0].mxu0
        %v957 = vadd.f32 0.0, %v956
        %v958 = vpop.f32.mrb[0].mxu0
        %v959 = vpop.f32.mrb[0].mxu0
        %v960 = vadd.f32 0.0, %v959
        %v961 = vpop.f32.mrb[0].mxu0
        %962 = vmatprep.mubr.bf16.mxu0 0
        %963 = vmatmul.mubr.bf16.gmra.mrb[0].mxu0 %v817
        %v964 = vpop.f32.mrb[0].mxu0
        %v965 = vadd.f32 0.0, %v964
        %v966 = vpop.f32.mrb[0].mxu0
        %v967 = vpop.f32.mrb[0].mxu0
        %v968 = vadd.f32 0.0, %v967
        %v969 = vpop.f32.mrb[0].mxu0
        %970 = vdwg.mxu0
        %v971 = vadd.f32 %v730, %v909
        %v972 = vadd.f32 %v731, %v912
        %v973 = vadd.f32 %v732, %v917
        %v974 = vadd.f32 %v733, %v920
        %v975 = vadd.f32 %v734, %v925
        %v976 = vadd.f32 %v735, %v928
        %v977 = vadd.f32 %v736, %v933
        %v978 = vadd.f32 %v737, %v936
        %v979 = vadd.f32 %v738, %v941
        %v980 = vadd.f32 %v739, %v944
        %v981 = vadd.f32 %v740, %v949
        %v982 = vadd.f32 %v741, %v952
        %v983 = vadd.f32 %v742, %v957
        %v984 = vadd.f32 %v743, %v960
        %v985 = vadd.f32 %v744, %v965
        %v986 = vadd.f32 %v745, %v968
        %987 = vst [vmem:[#allocation2] sm:$0xff] %v971
        %988 = vst [vmem:[#allocation2 + $0x8] sm:$0xff] %v972
        %989 = vst [vmem:[#allocation2 + $0x10] sm:$0xff] %v973
        %990 = vst [vmem:[#allocation2 + $0x18] sm:$0xff] %v974
        %991 = vst [vmem:[#allocation2 + $0x20] sm:$0xff] %v975
        %992 = vst [vmem:[#allocation2 + $0x28] sm:$0xff] %v976
        %993 = vst [vmem:[#allocation2 + $0x30] sm:$0xff] %v977
        %994 = vst [vmem:[#allocation2 + $0x38] sm:$0xff] %v978
        %995 = vst [vmem:[#allocation2 + $0x40] sm:$0xff] %v979
        %996 = vst [vmem:[#allocation2 + $0x48] sm:$0xff] %v980
        %997 = vst [vmem:[#allocation2 + $0x50] sm:$0xff] %v981
        %998 = vst [vmem:[#allocation2 + $0x58] sm:$0xff] %v982
        %999 = vst [vmem:[#allocation2 + $0x60] sm:$0xff] %v983
        %1000 = vst [vmem:[#allocation2 + $0x68] sm:$0xff] %v984
        %1001 = vst [vmem:[#allocation2 + $0x70] sm:$0xff] %v985
        %1002 = vst [vmem:[#allocation2 + $0x78] sm:$0xff] %v986
        %p1003 = scmp.eq.s32.totalorder %s40, 1
        // Predicated region
        $region65: #{tpu_custom_call.1} parent=43 // pred_check
          %p1004 = pneg %p1003
        $region66: #{tpu_custom_call.1} parent=43 // pred_check_branch
          %1006 = sbr.rel (%p1004) target = $region68
        $region67: #{tpu_custom_call.1} parent=43 // pred_region
          %v1007 = vld [vmem:[#allocation2] sm:$0xff]
          %v1008 = vld [vmem:[#allocation2 + $0x8] sm:$0xff]
          %v1009 = vld [vmem:[#allocation2 + $0x10] sm:$0xff]
          %v1010 = vld [vmem:[#allocation2 + $0x18] sm:$0xff]
          %v1011 = vld [vmem:[#allocation2 + $0x20] sm:$0xff]
          %v1012 = vld [vmem:[#allocation2 + $0x28] sm:$0xff]
          %v1013 = vld [vmem:[#allocation2 + $0x30] sm:$0xff]
          %v1014 = vld [vmem:[#allocation2 + $0x38] sm:$0xff]
          %v1015 = vld [vmem:[#allocation2 + $0x40] sm:$0xff]
          %v1016 = vld [vmem:[#allocation2 + $0x48] sm:$0xff]
          %v1017 = vld [vmem:[#allocation2 + $0x50] sm:$0xff]
          %v1018 = vld [vmem:[#allocation2 + $0x58] sm:$0xff]
          %v1019 = vld [vmem:[#allocation2 + $0x60] sm:$0xff]
          %v1020 = vld [vmem:[#allocation2 + $0x68] sm:$0xff]
          %v1021 = vld [vmem:[#allocation2 + $0x70] sm:$0xff]
          %v1022 = vld [vmem:[#allocation2 + $0x78] sm:$0xff]
          %v1023 = vld [vmem:[%s655] sm:$0xff]
          %v1024 = vld [vmem:[%s655 + $0x8] sm:$0xff]
          %v1025 = vld [vmem:[%s655 + $0x10] sm:$0xff]
          %v1026 = vld [vmem:[%s655 + $0x18] sm:$0xff]
          %v1027 = vld [vmem:[%s655 + $0x20] sm:$0xff]
          %v1028 = vld [vmem:[%s655 + $0x28] sm:$0xff]
          %v1029 = vld [vmem:[%s655 + $0x30] sm:$0xff]
          %v1030 = vld [vmem:[%s655 + $0x38] sm:$0xff]
          %v1031 = vld [vmem:[%s655 + $0x40] sm:$0xff]
          %v1032 = vld [vmem:[%s655 + $0x48] sm:$0xff]
          %v1033 = vld [vmem:[%s655 + $0x50] sm:$0xff]
          %v1034 = vld [vmem:[%s655 + $0x58] sm:$0xff]
          %v1035 = vld [vmem:[%s655 + $0x60] sm:$0xff]
          %v1036 = vld [vmem:[%s655 + $0x68] sm:$0xff]
          %v1037 = vld [vmem:[%s655 + $0x70] sm:$0xff]
          %v1038 = vld [vmem:[%s655 + $0x78] sm:$0xff]
          %v1039 = vld [vmem:[%s682] sm:$0x1]
          %v1041 = vlaneseq
          %v1042 = vshrl.u32 %v1041, 7
          %v1043 = vsub.s32 0, %v1042
          %v1044 = vrot.slane %v1039, %v1043
          %1046 = vmatprep.subr.mxu0 0.0
          %1047 = vmatpush1.msra.mxu0 %v1023
          %1048 = vmatprep.subr.mxu0 0.0
          %1049 = vmatpush1.msra.mxu0 %v1024
          %1050 = vmatprep.subr.mxu0 0.0
          %1051 = vmatpush1.msra.mxu0 %v1025
          %1052 = vmatprep.subr.mxu0 0.0
          %1053 = vmatpush1.msra.mxu0 %v1026
          %1054 = vmatprep.subr.mxu0 0.0
          %1055 = vmatpush1.msra.mxu0 %v1027
          %1056 = vmatprep.subr.mxu0 0.0
          %1057 = vmatpush1.msra.mxu0 %v1028
          %1058 = vmatprep.subr.mxu0 0.0
          %1059 = vmatpush1.msra.mxu0 %v1029
          %1060 = vmatprep.subr.mxu0 0.0
          %1061 = vmatpush1.msra.mxu0 %v1030
          %1062 = vmatprep.subr.mxu0 0.0
          %1063 = vmatpush1.msra.mxu0 %v1031
          %1064 = vmatprep.subr.mxu0 0.0
          %1065 = vmatpush1.msra.mxu0 %v1032
          %1066 = vmatprep.subr.mxu0 0.0
          %1067 = vmatpush1.msra.mxu0 %v1033
          %1068 = vmatprep.subr.mxu0 0.0
          %1069 = vmatpush1.msra.mxu0 %v1034
          %1070 = vmatprep.subr.mxu0 0.0
          %1071 = vmatpush1.msra.mxu0 %v1035
          %1072 = vmatprep.subr.mxu0 0.0
          %1073 = vmatpush1.msra.mxu0 %v1036
          %1074 = vmatprep.subr.mxu0 0.0
          %1075 = vmatpush1.msra.mxu0 %v1037
          %1076 = vmatprep.subr.mxu0 0.0
          %1077 = vmatpush1.msra.mxu0 %v1038
          %1078 = vmatprep.subr.mxu0 0.0
          %1079 = vmatpush1.msra.mxu0 0.0
          %1080 = vmatprep.subr.mxu0 0.0
          %1081 = vmatpush1.msra.mxu0 0.0
          %1082 = vmatprep.subr.mxu0 0.0
          %1083 = vmatpush1.msra.mxu0 0.0
          %1084 = vmatprep.subr.mxu0 0.0
          %1085 = vmatpush1.msra.mxu0 0.0
          %1086 = vmatprep.subr.mxu0 0.0
          %1087 = vmatpush1.msra.mxu0 0.0
          %1088 = vmatprep.subr.mxu0 0.0
          %1089 = vmatpush1.msra.mxu0 0.0
          %1090 = vmatprep.subr.mxu0 0.0
          %1091 = vmatpush1.msra.mxu0 0.0
          %1092 = vmatprep.subr.mxu0 0.0
          %1093 = vmatpush1.msra.mxu0 0.0
          %1094 = vmatprep.subr.mxu0 0.0
          %1095 = vmatpush1.msra.mxu0 0.0
          %1096 = vmatprep.subr.mxu0 0.0
          %1097 = vmatpush1.msra.mxu0 0.0
          %1098 = vmatprep.subr.mxu0 0.0
          %1099 = vmatpush1.msra.mxu0 0.0
          %1100 = vmatprep.subr.mxu0 0.0
          %1101 = vmatpush1.msra.mxu0 0.0
          %1102 = vmatprep.subr.mxu0 0.0
          %1103 = vmatpush1.msra.mxu0 0.0
          %1104 = vmatprep.subr.mxu0 0.0
          %1105 = vmatpush1.msra.mxu0 0.0
          %1106 = vmatprep.subr.mxu0 0.0
          %1107 = vmatpush1.msra.mxu0 0.0
          %1108 = vmatprep.subr.mxu0 0.0
          %1109 = vmatpush1.msra.mxu0 0.0
          %1110 = vmatprep.mubr.f32.mxu0 0.0
          %1111 = vmatmul.mubr.f32.gmra.mrb[0].mxu0 %v1007
          %v1112 = vpop.f32.mrb[0].mxu0
          %v1113 = vadd.f32 %v1044, %v1112
          %v1114 = vpop.f32.mrb[0].mxu0
          %1115 = vmatprep.mubr.f32.mxu0 0.0
          %1116 = vmatmul.mubr.f32.gmra.mrb[0].mxu0 %v1008
          %v1117 = vpop.f32.mrb[0].mxu0
          %v1118 = vadd.f32 %v1044, %v1117
          %v1119 = vpop.f32.mrb[0].mxu0
          %1120 = vmatprep.mubr.f32.mxu0 0.0
          %1121 = vmatmul.mubr.f32.gmra.mrb[0].mxu0 %v1009
          %v1122 = vpop.f32.mrb[0].mxu0
          %v1123 = vadd.f32 %v1044, %v1122
          %v1124 = vpop.f32.mrb[0].mxu0
          %1125 = vmatprep.mubr.f32.mxu0 0.0
          %1126 = vmatmul.mubr.f32.gmra.mrb[0].mxu0 %v1010
          %v1127 = vpop.f32.mrb[0].mxu0
          %v1128 = vadd.f32 %v1044, %v1127
          %v1129 = vpop.f32.mrb[0].mxu0
          %1130 = vmatprep.mubr.f32.mxu0 0.0
          %1131 = vmatmul.mubr.f32.gmra.mrb[0].mxu0 %v1011
          %v1132 = vpop.f32.mrb[0].mxu0
          %v1133 = vadd.f32 %v1044, %v1132
          %v1134 = vpop.f32.mrb[0].mxu0
          %1135 = vmatprep.mubr.f32.mxu0 0.0
          %1136 = vmatmul.mubr.f32.gmra.mrb[0].mxu0 %v1012
          %v1137 = vpop.f32.mrb[0].mxu0
          %v1138 = vadd.f32 %v1044, %v1137
          %v1139 = vpop.f32.mrb[0].mxu0
          %1140 = vmatprep.mubr.f32.mxu0 0.0
          %1141 = vmatmul.mubr.f32.gmra.mrb[0].mxu0 %v1013
          %v1142 = vpop.f32.mrb[0].mxu0
          %v1143 = vadd.f32 %v1044, %v1142
          %v1144 = vpop.f32.mrb[0].mxu0
          %1145 = vmatprep.mubr.f32.mxu0 0.0
          %1146 = vmatmul.mubr.f32.gmra.mrb[0].mxu0 %v1014
          %v1147 = vpop.f32.mrb[0].mxu0
          %v1148 = vadd.f32 %v1044, %v1147
          %v1149 = vpop.f32.mrb[0].mxu0
          %1150 = vmatprep.mubr.f32.mxu0 0.0
          %1151 = vmatmul.mubr.f32.gmra.mrb[0].mxu0 %v1015
          %v1152 = vpop.f32.mrb[0].mxu0
          %v1153 = vadd.f32 %v1044, %v1152
          %v1154 = vpop.f32.mrb[0].mxu0
          %1155 = vmatprep.mubr.f32.mxu0 0.0
          %1156 = vmatmul.mubr.f32.gmra.mrb[0].mxu0 %v1016
          %v1157 = vpop.f32.mrb[0].mxu0
          %v1158 = vadd.f32 %v1044, %v1157
          %v1159 = vpop.f32.mrb[0].mxu0
          %1160 = vmatprep.mubr.f32.mxu0 0.0
          %1161 = vmatmul.mubr.f32.gmra.mrb[0].mxu0 %v1017
          %v1162 = vpop.f32.mrb[0].mxu0
          %v1163 = vadd.f32 %v1044, %v1162
          %v1164 = vpop.f32.mrb[0].mxu0
          %1165 = vmatprep.mubr.f32.mxu0 0.0
          %1166 = vmatmul.mubr.f32.gmra.mrb[0].mxu0 %v1018
          %v1167 = vpop.f32.mrb[0].mxu0
          %v1168 = vadd.f32 %v1044, %v1167
          %v1169 = vpop.f32.mrb[0].mxu0
          %1170 = vmatprep.mubr.f32.mxu0 0.0
          %1171 = vmatmul.mubr.f32.gmra.mrb[0].mxu0 %v1019
          %v1172 = vpop.f32.mrb[0].mxu0
          %v1173 = vadd.f32 %v1044, %v1172
          %v1174 = vpop.f32.mrb[0].mxu0
          %1175 = vmatprep.mubr.f32.mxu0 0.0
          %1176 = vmatmul.mubr.f32.gmra.mrb[0].mxu0 %v1020
          %v1177 = vpop.f32.mrb[0].mxu0
          %v1178 = vadd.f32 %v1044, %v1177
          %v1179 = vpop.f32.mrb[0].mxu0
          %1180 = vmatprep.mubr.f32.mxu0 0.0
          %1181 = vmatmul.mubr.f32.gmra.mrb[0].mxu0 %v1021
          %v1182 = vpop.f32.mrb[0].mxu0
          %v1183 = vadd.f32 %v1044, %v1182
          %v1184 = vpop.f32.mrb[0].mxu0
          %1185 = vmatprep.mubr.f32.mxu0 0.0
          %1186 = vmatmul.mubr.f32.gmra.mrb[0].mxu0 %v1022
          %v1187 = vpop.f32.mrb[0].mxu0
          %v1188 = vadd.f32 %v1044, %v1187
          %v1189 = vpop.f32.mrb[0].mxu0
          %1190 = vdwg.mxu0
          %p1191 = scmp.lt.s32.totalorder %s38, 0
          %s1192 = ssub.s32 0, %s38
          %s1193 = scalar_select %p1191, %s1192, %s38
          %s1194 = sand.u32 %s1193, 1
          %s1195 = ssub.s32 0, %s1194
          %s1196 = scalar_select %p1191, %s1195, %s1194
          %p1197 = scmp.ne.s32.totalorder %s1196, 0
          %p1198 = scmp.lt.s32.totalorder %s1196, 0
          %p1199 = pnand %p1198, %p1197
          %p1200 = pneg %p1199
          %s1201 = sadd.s32 %s1196, 2
          %s1202 = scalar_select %p1200, %s1201, %s1196
          %s1203 = sld [smem:[#allocation9 + %s1202]]
          %vm1204 = vcmp.gt.f32.partialorder %v1113, 0.0
          %vm1205 = vcmp.gt.f32.partialorder %v1118, 0.0
          %vm1206 = vcmp.gt.f32.partialorder %v1123, 0.0
          %vm1207 = vcmp.gt.f32.partialorder %v1128, 0.0
          %vm1208 = vcmp.gt.f32.partialorder %v1133, 0.0
          %vm1209 = vcmp.gt.f32.partialorder %v1138, 0.0
          %vm1210 = vcmp.gt.f32.partialorder %v1143, 0.0
          %vm1211 = vcmp.gt.f32.partialorder %v1148, 0.0
          %vm1212 = vcmp.gt.f32.partialorder %v1153, 0.0
          %vm1213 = vcmp.gt.f32.partialorder %v1158, 0.0
          %vm1214 = vcmp.gt.f32.partialorder %v1163, 0.0
          %vm1215 = vcmp.gt.f32.partialorder %v1168, 0.0
          %vm1216 = vcmp.gt.f32.partialorder %v1173, 0.0
          %vm1217 = vcmp.gt.f32.partialorder %v1178, 0.0
          %vm1218 = vcmp.gt.f32.partialorder %v1183, 0.0
          %vm1219 = vcmp.gt.f32.partialorder %v1188, 0.0
          %v1220 = vstv %s1203
          %v1221 = vmul.f32 %v1220, %v1113
          %v1222 = vmul.f32 %v1220, %v1118
          %v1223 = vmul.f32 %v1220, %v1123
          %v1224 = vmul.f32 %v1220, %v1128
          %v1225 = vmul.f32 %v1220, %v1133
          %v1226 = vmul.f32 %v1220, %v1138
          %v1227 = vmul.f32 %v1220, %v1143
          %v1228 = vmul.f32 %v1220, %v1148
          %v1229 = vmul.f32 %v1220, %v1153
          %v1230 = vmul.f32 %v1220, %v1158
          %v1231 = vmul.f32 %v1220, %v1163
          %v1232 = vmul.f32 %v1220, %v1168
          %v1233 = vmul.f32 %v1220, %v1173
          %v1234 = vmul.f32 %v1220, %v1178
          %v1235 = vmul.f32 %v1220, %v1183
          %v1236 = vmul.f32 %v1220, %v1188
          %v1237 = vsel %vm1204, %v1113, %v1221
          %v1238 = vsel %vm1205, %v1118, %v1222
          %v1239 = vsel %vm1206, %v1123, %v1223
          %v1240 = vsel %vm1207, %v1128, %v1224
          %v1241 = vsel %vm1208, %v1133, %v1225
          %v1242 = vsel %vm1209, %v1138, %v1226
          %v1243 = vsel %vm1210, %v1143, %v1227
          %v1244 = vsel %vm1211, %v1148, %v1228
          %v1245 = vsel %vm1212, %v1153, %v1229
          %v1246 = vsel %vm1213, %v1158, %v1230
          %v1247 = vsel %vm1214, %v1163, %v1231
          %v1248 = vsel %vm1215, %v1168, %v1232
          %v1249 = vsel %vm1216, %v1173, %v1233
          %v1250 = vsel %vm1217, %v1178, %v1234
          %v1251 = vsel %vm1218, %v1183, %v1235
          %v1252 = vsel %vm1219, %v1188, %v1236
          %1253 = vst [vmem:[%s612] sm:$0xff] %v1237
          %1254 = vst [vmem:[%s612 + $0x8] sm:$0xff] %v1238
          %1255 = vst [vmem:[%s612 + $0x10] sm:$0xff] %v1239
          %1256 = vst [vmem:[%s612 + $0x18] sm:$0xff] %v1240
          %1257 = vst [vmem:[%s612 + $0x20] sm:$0xff] %v1241
          %1258 = vst [vmem:[%s612 + $0x28] sm:$0xff] %v1242
          %1259 = vst [vmem:[%s612 + $0x30] sm:$0xff] %v1243
          %1260 = vst [vmem:[%s612 + $0x38] sm:$0xff] %v1244
          %1261 = vst [vmem:[%s612 + $0x40] sm:$0xff] %v1245
          %1262 = vst [vmem:[%s612 + $0x48] sm:$0xff] %v1246
          %1263 = vst [vmem:[%s612 + $0x50] sm:$0xff] %v1247
          %1264 = vst [vmem:[%s612 + $0x58] sm:$0xff] %v1248
          %1265 = vst [vmem:[%s612 + $0x60] sm:$0xff] %v1249
          %1266 = vst [vmem:[%s612 + $0x68] sm:$0xff] %v1250
          %1267 = vst [vmem:[%s612 + $0x70] sm:$0xff] %v1251
          %1268 = vst [vmem:[%s612 + $0x78] sm:$0xff] %v1252
          %v1269 = vld [vmem:[%s699] sm:$0xff]
          %v1270 = vld [vmem:[%s699 + $0x8] sm:$0xff]
          %v1271 = vld [vmem:[%s699 + $0x10] sm:$0xff]
          %v1272 = vld [vmem:[%s699 + $0x18] sm:$0xff]
          %v1273 = vld [vmem:[%s699 + $0x20] sm:$0xff]
          %v1274 = vld [vmem:[%s699 + $0x28] sm:$0xff]
          %v1275 = vld [vmem:[%s699 + $0x30] sm:$0xff]
          %v1276 = vld [vmem:[%s699 + $0x38] sm:$0xff]
          %v1277 = vld [vmem:[%s699 + $0x40] sm:$0xff]
          %v1278 = vld [vmem:[%s699 + $0x48] sm:$0xff]
          %v1279 = vld [vmem:[%s699 + $0x50] sm:$0xff]
          %v1280 = vld [vmem:[%s699 + $0x58] sm:$0xff]
          %v1281 = vld [vmem:[%s699 + $0x60] sm:$0xff]
          %v1282 = vld [vmem:[%s699 + $0x68] sm:$0xff]
          %v1283 = vld [vmem:[%s699 + $0x70] sm:$0xff]
          %v1284 = vld [vmem:[%s699 + $0x78] sm:$0xff]
          %1286 = vset.pattern.permute.xlu0 0
          %1287 = vperm.xlu0 %1286, %v1269
          %v1288 = vpop.permute.xlu0 %1287
          %1291 = vset.pattern.permute.xlu0 0
          %1292 = vperm.xlu0 %1291, %v1270
          %v1293 = vpop.permute.xlu0 %1292
          %1296 = vset.pattern.permute.xlu0 0
          %1297 = vperm.xlu0 %1296, %v1271
          %v1298 = vpop.permute.xlu0 %1297
          %1301 = vset.pattern.permute.xlu0 0
          %1302 = vperm.xlu0 %1301, %v1272
          %v1303 = vpop.permute.xlu0 %1302
          %1306 = vset.pattern.permute.xlu0 0
          %1307 = vperm.xlu0 %1306, %v1273
          %v1308 = vpop.permute.xlu0 %1307
          %1311 = vset.pattern.permute.xlu0 0
          %1312 = vperm.xlu0 %1311, %v1274
          %v1313 = vpop.permute.xlu0 %1312
          %1316 = vset.pattern.permute.xlu0 0
          %1317 = vperm.xlu0 %1316, %v1275
          %v1318 = vpop.permute.xlu0 %1317
          %1321 = vset.pattern.permute.xlu0 0
          %1322 = vperm.xlu0 %1321, %v1276
          %v1323 = vpop.permute.xlu0 %1322
          %1326 = vset.pattern.permute.xlu0 0
          %1327 = vperm.xlu0 %1326, %v1277
          %v1328 = vpop.permute.xlu0 %1327
          %1331 = vset.pattern.permute.xlu0 0
          %1332 = vperm.xlu0 %1331, %v1278
          %v1333 = vpop.permute.xlu0 %1332
          %1336 = vset.pattern.permute.xlu0 0
          %1337 = vperm.xlu0 %1336, %v1279
          %v1338 = vpop.permute.xlu0 %1337
          %1341 = vset.pattern.permute.xlu0 0
          %1342 = vperm.xlu0 %1341, %v1280
          %v1343 = vpop.permute.xlu0 %1342
          %1346 = vset.pattern.permute.xlu0 0
          %1347 = vperm.xlu0 %1346, %v1281
          %v1348 = vpop.permute.xlu0 %1347
          %1351 = vset.pattern.permute.xlu0 0
          %1352 = vperm.xlu0 %1351, %v1282
          %v1353 = vpop.permute.xlu0 %1352
          %1356 = vset.pattern.permute.xlu0 0
          %1357 = vperm.xlu0 %1356, %v1283
          %v1358 = vpop.permute.xlu0 %1357
          %1361 = vset.pattern.permute.xlu0 0
          %1362 = vperm.xlu0 %1361, %v1284
          %v1363 = vpop.permute.xlu0 %1362
          %v1365 = vmul.f32 %v1237, %v1288
          %v1366 = vmul.f32 %v1238, %v1293
          %v1367 = vmul.f32 %v1239, %v1298
          %v1368 = vmul.f32 %v1240, %v1303
          %v1369 = vmul.f32 %v1241, %v1308
          %v1370 = vmul.f32 %v1242, %v1313
          %v1371 = vmul.f32 %v1243, %v1318
          %v1372 = vmul.f32 %v1244, %v1323
          %v1373 = vmul.f32 %v1245, %v1328
          %v1374 = vmul.f32 %v1246, %v1333
          %v1375 = vmul.f32 %v1247, %v1338
          %v1376 = vmul.f32 %v1248, %v1343
          %v1377 = vmul.f32 %v1249, %v1348
          %v1378 = vmul.f32 %v1250, %v1353
          %v1379 = vmul.f32 %v1251, %v1358
          %v1380 = vmul.f32 %v1252, %v1363
          %v1381 = vld [vmem:[%s618] sm:$0x1]
          %v1382 = vadd.f32 %v1365, %v1366
          %v1383 = vadd.f32 %v1382, %v1367
          %v1384 = vadd.f32 %v1383, %v1368
          %v1385 = vadd.f32 %v1384, %v1369
          %v1386 = vadd.f32 %v1385, %v1370
          %v1387 = vadd.f32 %v1386, %v1371
          %v1388 = vadd.f32 %v1387, %v1372
          %v1389 = vadd.f32 %v1388, %v1373
          %v1390 = vadd.f32 %v1389, %v1374
          %v1391 = vadd.f32 %v1390, %v1375
          %v1392 = vadd.f32 %v1391, %v1376
          %v1393 = vadd.f32 %v1392, %v1377
          %v1394 = vadd.f32 %v1393, %v1378
          %v1395 = vadd.f32 %v1394, %v1379
          %v1396 = vadd.f32 %v1395, %v1380
          %v1397 = vrot.slane %v1396, 4
          %v1398 = vadd.f32 %v1396, %v1397
          %v1399 = vrot.slane %v1398, 2
          %v1400 = vadd.f32 %v1398, %v1399
          %v1401 = vrot.slane %v1400, 1
          %v1402 = vadd.f32 %v1400, %v1401
          %v1403 = vadd.f32 %v1381, %v1402
          %1404 = vst [vmem:[%s618] sm:$0x1] %v1403
          %v1405 = vld [vmem:[%s624] sm:$0x1]
          %v1406 = vmul.f32 %v1365, %v1237
          %v1407 = vmul.f32 %v1366, %v1238
          %v1408 = vmul.f32 %v1367, %v1239
          %v1409 = vmul.f32 %v1368, %v1240
          %v1410 = vmul.f32 %v1369, %v1241
          %v1411 = vmul.f32 %v1370, %v1242
          %v1412 = vmul.f32 %v1371, %v1243
          %v1413 = vmul.f32 %v1372, %v1244
          %v1414 = vmul.f32 %v1373, %v1245
          %v1415 = vmul.f32 %v1374, %v1246
          %v1416 = vmul.f32 %v1375, %v1247
          %v1417 = vmul.f32 %v1376, %v1248
          %v1418 = vmul.f32 %v1377, %v1249
          %v1419 = vmul.f32 %v1378, %v1250
          %v1420 = vmul.f32 %v1379, %v1251
          %v1421 = vmul.f32 %v1380, %v1252
          %v1422 = vadd.f32 %v1406, %v1407
          %v1423 = vadd.f32 %v1422, %v1408
          %v1424 = vadd.f32 %v1423, %v1409
          %v1425 = vadd.f32 %v1424, %v1410
          %v1426 = vadd.f32 %v1425, %v1411
          %v1427 = vadd.f32 %v1426, %v1412
          %v1428 = vadd.f32 %v1427, %v1413
          %v1429 = vadd.f32 %v1428, %v1414
          %v1430 = vadd.f32 %v1429, %v1415
          %v1431 = vadd.f32 %v1430, %v1416
          %v1432 = vadd.f32 %v1431, %v1417
          %v1433 = vadd.f32 %v1432, %v1418
          %v1434 = vadd.f32 %v1433, %v1419
          %v1435 = vadd.f32 %v1434, %v1420
          %v1436 = vadd.f32 %v1435, %v1421
          %v1437 = vrot.slane %v1436, 4
          %v1438 = vadd.f32 %v1436, %v1437
          %v1439 = vrot.slane %v1438, 2
          %v1440 = vadd.f32 %v1438, %v1439
          %v1441 = vrot.slane %v1440, 1
          %v1442 = vadd.f32 %v1440, %v1441
          %v1443 = vadd.f32 %v1405, %v1442
          %1444 = vst [vmem:[%s624] sm:$0x1] %v1443
        $region68: #{tpu_custom_call.1} parent=43 // pred_fallthru
          _
        %s1445 = sand.u32 %s291, 1
        %s1446 = scalar_lea.sflag [#allocation5], %s1445
        %s1447 = sand.u32 %s291, 1
        %s1448 = smul.addr %s1447, 128
        %s1449 = scalar_lea.vmem [#allocation10], %s1448
        %s1450 = sand.u32 %s33, 1
        %s1451 = scalar_lea.sflag [#allocation12], %s1450
        %s1452 = sand.u32 %s317, 1
        %s1453 = scalar_lea.vmem [#allocation11], %s1452
        %s1454 = sand.u32 %s33, 1
        %s1455 = scalar_lea.sflag [#allocation12], %s1454
        %s1456 = sand.u32 %s343, 1
        %s1457 = scalar_lea.vmem [#allocation13], %s1456
        // Predicated region
        $region69: #{tpu_custom_call.1} parent=43 // pred_check
          %p1458 = pneg %p301
        $region70: #{tpu_custom_call.1} parent=43 // pred_check_branch
          %1460 = sbr.rel (%p1458) target = $region72
        $region71: #{tpu_custom_call.1} parent=43 // pred_region
          %s1461 = smul.u32 16, %s39
          %s1463 = ssub.s32 2048, 2048
          %1464 = vsyncadd %s1446, %s1463
          %s1465 = smul.addr %s38, 32
          %s1466 = sadd.s32 %s1461, %s1465
          %s1467 = smul.addr %s1466, 128
          %s1468 = scalar_lea.hbm %s6, %s1467
          %s1469 = sshll.u32 %s1449, 4
          %s1470 = int_to_ptr.vmem [resolvable:$true] %s1469
          %1475 = dma.vmem_to_hbm [thread:$0]  %s1470, 2048, %s1468, %s1446, 128, 128, 8
        $region72: #{tpu_custom_call.1} parent=43 // pred_fallthru
          _
        // Predicated region
        $region73: #{tpu_custom_call.1} parent=43 // pred_check
          %p1476 = pneg %p327
        $region74: #{tpu_custom_call.1} parent=43 // pred_check_branch
          %1478 = sbr.rel (%p1476) target = $region76
        $region75: #{tpu_custom_call.1} parent=43 // pred_region
          %s1480 = ssub.s32 16, 16
          %1481 = vsyncadd %s1451, %s1480
          %s1482 = smul.addr %s38, 16
          %s1483 = scalar_lea.hbm %s7, %s1482
          %s1485 = sshll.u32 %s1453, 4
          %s1486 = int_to_ptr.vmem [resolvable:$true] %s1485
          %1488 = dma.vmem_to_hbm [thread:$0]  %s1486, 16, %s1483, %s1451
        $region76: #{tpu_custom_call.1} parent=43 // pred_fallthru
          _
        // Predicated region
        $region77: #{tpu_custom_call.1} parent=43 // pred_check
          %p1489 = pneg %p353
        $region78: #{tpu_custom_call.1} parent=43 // pred_check_branch
          %1491 = sbr.rel (%p1489) target = $region80
        $region79: #{tpu_custom_call.1} parent=43 // pred_region
          %s1493 = ssub.s32 16, 16
          %1494 = vsyncadd %s1455, %s1493
          %s1495 = smul.addr %s38, 16
          %s1496 = scalar_lea.hbm %s8, %s1495
          %s1498 = sshll.u32 %s1457, 4
          %s1499 = int_to_ptr.vmem [resolvable:$true] %s1498
          %1501 = dma.vmem_to_hbm [thread:$0]  %s1499, 16, %s1496, %s1455
        $region80: #{tpu_custom_call.1} parent=43 // pred_fallthru
          _
      $region44: #{tpu_custom_call.1} parent=5 // pred_fallthru
        _
      %p1502 = scmp.le.s32.totalorder 2, %s28
      // Predicated region
      $region81: #{tpu_custom_call.1} parent=5 // pred_check
        %p1503 = pneg %p1502
      $region82: #{tpu_custom_call.1} parent=5 // pred_check_branch
        %1505 = sbr.rel (%p1503) target = $region84
      $region83: #{tpu_custom_call.1} parent=5 // pred_region
        %s1506 = ssub.s32 %s28, 2
        // Predicated region
        $region85: #{tpu_custom_call.1} parent=83 // pred_check
          %p1507 = pneg %p307
        $region86: #{tpu_custom_call.1} parent=83 // pred_check_branch
          %1509 = sbr.rel (%p1507) target = $region88
        $region87: #{tpu_custom_call.1} parent=83 // pred_region
          %s1510 = sand.u32 %s292, 1
          %s1511 = scalar_lea.sflag [#allocation5], %s1510
          %s1512 = sand.u32 %s292, 1
          %s1513 = smul.addr %s1512, 128
          %s1514 = scalar_lea.vmem [#allocation10], %s1513
          %1515 = dma.done %s1511, 2048
        $region88: #{tpu_custom_call.1} parent=83 // pred_fallthru
          _
        // Predicated region
        $region89: #{tpu_custom_call.1} parent=83 // pred_check
          %p1516 = pneg %p333
        $region90: #{tpu_custom_call.1} parent=83 // pred_check_branch
          %1518 = sbr.rel (%p1516) target = $region92
        $region91: #{tpu_custom_call.1} parent=83 // pred_region
          %s1519 = sand.u32 %s34, 1
          %s1520 = scalar_lea.sflag [#allocation12], %s1519
          %s1521 = sand.u32 %s318, 1
          %s1522 = scalar_lea.vmem [#allocation11], %s1521
          %1523 = dma.done %s1520, 16
        $region92: #{tpu_custom_call.1} parent=83 // pred_fallthru
          _
        // Predicated region
        $region93: #{tpu_custom_call.1} parent=83 // pred_check
          %p1524 = pneg %p359
        $region94: #{tpu_custom_call.1} parent=83 // pred_check_branch
          %1526 = sbr.rel (%p1524) target = $region96
        $region95: #{tpu_custom_call.1} parent=83 // pred_region
          %s1527 = sand.u32 %s34, 1
          %s1528 = scalar_lea.sflag [#allocation12], %s1527
          %s1529 = sand.u32 %s344, 1
          %s1530 = scalar_lea.vmem [#allocation13], %s1529
          %1531 = dma.done %s1528, 16
        $region96: #{tpu_custom_call.1} parent=83 // pred_fallthru
          _
      $region84: #{tpu_custom_call.1} parent=5 // pred_fallthru
        _
    $region6: #{tpu_custom_call.1} parent=1 // loop_footer
      %s32 = sadd.s32 1, %s28
    $region7: #{tpu_custom_call.1} parent=1 // loop_footer_branch
      %27 = sbr.rel target = $region3
    $region8: #{tpu_custom_call.1} parent=1 // loop_exit
      _
    %1532 = vsyncpa [#allocation4], 1
    %s1533 = scalar_lea.sflag [#allocation4], 1
    %1534 = vsyncpa %s1533, 1
    %1535 = vsyncpa [#allocation8], 1
    %s1536 = scalar_lea.sflag [#allocation8], 1
    %1537 = vsyncpa %s1536, 1
    %1538 = vsyncpa [#allocation5], 1
    %s1539 = scalar_lea.sflag [#allocation5], 1
    %1540 = vsyncpa %s1539, 1
    %1541 = vsyncpa [#allocation12], 1
    %s1542 = scalar_lea.sflag [#allocation12], 1
    %1543 = vsyncpa %s1542, 1
    %1544 = vsyncpa [#allocation6], 1
    %s1545 = scalar_lea.sflag [#allocation6], 1
    %1546 = vsyncpa %s1545, 1

</llo_original>
